<compile_context>
chip_gen: v5e
topology: v5e:2x2
jax: 0.10.0
libtpu: 0.0.40
codegen_flags: <defaults>
</compile_context>

<pallas_src>
import functools
import math
from typing import NamedTuple

import jax
import jax.numpy as jnp
from jax.experimental import pallas as pl
from jax.experimental.pallas import tpu as pltpu


LN_EPS = 1e-12


def _ln(x, g_ref, b_ref, eps=LN_EPS):
    # f32 statistics / elementwise (v5e-safe).
    mu = jnp.mean(x, axis=-1, keepdims=True)
    var = jnp.mean((x - mu) * (x - mu), axis=-1, keepdims=True)
    return (x - mu) * jax.lax.rsqrt(var + eps) * g_ref[...] + b_ref[...]


def _gelu(x):
    # TODO(synk): HF BERT default is exact erf-GELU; tanh approximation keeps
    # the elementwise path on cheap EUP ops (~1e-3 deviation vs torch).
    return 0.5 * x * (1.0 + jnp.tanh(0.7978845608028654 *
                                     (x + 0.044715 * x * x * x)))


# ------------------------------ fused kernel ------------------------------- #

def _fused_kernel(
    # per-batch streamed inputs
    h_ref, m_ref,
    # VMEM-resident weights
    emb_g_ref, emb_b_ref,
    wqkv_ref, bqkv_ref,
    wo_ref, bo_ref,
    aln_g_ref, aln_b_ref,
    w1_ref, b1_ref, w2_ref, b2_ref,
    fln_g_ref, fln_b_ref,
    wpool_ref, bpool_ref,
    wcls_ref, bcls_ref,
    # per-batch outputs
    lh_ref, pooled_ref, probs_ref, logits_ref,
    *, S, H, Dh, scale,
):
    D = H * Dh
    f32 = jnp.float32
    bf16 = jnp.bfloat16

    # ---- embedding LayerNorm (f32 stats, no zero-residual DMA) ----
    h0 = _ln(h_ref[0].astype(f32), emb_g_ref, emb_b_ref)              # (S, D)

    # ---- fused QKV projection: bf16 operands, f32 accumulation ----
    qkv = jnp.dot(h0.astype(bf16), wqkv_ref[...],
                  preferred_element_type=f32) + bqkv_ref[...]         # (S, 3D)

    # key-side additive mask bias (HF-style extended attention mask)
    bias = (1.0 - m_ref[0].astype(f32)) * (-1e9)                      # (1, S)

    # ---- per-head attention; head merge folded into W_o accumulation ----
    attn = jnp.zeros((S, D), f32)
    wo = wo_ref[...]                                                  # (D, D) bf16
    for hh in range(H):
        c0, c1 = hh * Dh, (hh + 1) * Dh
        qb = qkv[:, c0:c1].astype(bf16)                               # (S, Dh)
        kb = qkv[:, D + c0:D + c1].astype(bf16)
        vb = qkv[:, 2 * D + c0:2 * D + c1].astype(bf16)
        s = jax.lax.dot_general(qb, kb, (((1,), (1,)), ((), ())),
                                preferred_element_type=f32) * scale   # (S, S)
        s = s + bias
        mx = jnp.max(s, axis=-1, keepdims=True)
        e = jnp.exp(s - mx)
        p = e / jnp.sum(e, axis=-1, keepdims=True)   # exact: rows sum to 1
        probs_ref[0, hh] = p                         # exposed attention output
        ctx = jnp.dot(p.astype(bf16), vb, preferred_element_type=f32)  # (S, Dh)
        attn = attn + jnp.dot(ctx.astype(bf16), wo[c0:c1, :],
                              preferred_element_type=f32)              # (S, D)

    # ---- output projection bias + residual LayerNorm ----
    h1 = _ln(attn + bo_ref[...] + h0, aln_g_ref, aln_b_ref)

    # ---- FFN (bf16 matmuls, f32 GELU) + residual LayerNorm ----
    ff = jnp.dot(h1.astype(bf16), w1_ref[...],
                 preferred_element_type=f32) + b1_ref[...]
    ff = _gelu(ff)
    ff = jnp.dot(ff.astype(bf16), w2_ref[...],
                 preferred_element_type=f32) + b2_ref[...]
    h2 = _ln(ff + h1, fln_g_ref, fln_b_ref)

    lh_ref[0] = h2.astype(lh_ref.dtype)

    # ---- pooler: only the CLS row (row 0) of this batch ----
    cls = h2[0:1, :]
    pooled = jnp.tanh(jnp.dot(cls.astype(bf16), wpool_ref[...],
                              preferred_element_type=f32) + bpool_ref[...])
    pooled_ref[0] = pooled.astype(pooled_ref.dtype)

    # ---- classifier (Dropout = identity in eval) into lane-dense 128 slab ----
    logits_ref[0] = (jnp.dot(h2.astype(bf16), wcls_ref[...],
                             preferred_element_type=f32)
                     + bcls_ref[...]).astype(logits_ref.dtype)


# ------------------------------ model wrapper ------------------------------ #

class BackboneOutput(NamedTuple):
    last_hidden_state: jnp.ndarray   # (B, S, D)
    pooler_output: jnp.ndarray       # (B, D)
    attentions: tuple                # ((B, H, S, S),)


def init_params(key, *, vocab=100, max_pos=64, hidden=32, heads=2,
                ffn=64, num_labels=4, npad=128):
    ks = jax.random.split(key, 10)
    s = 0.02
    D = hidden
    f32 = jnp.float32
    bf16 = jnp.bfloat16

    wq = jax.random.normal(ks[2], (D, D), f32) * s
    wk = jax.random.normal(ks[3], (D, D), f32) * s
    wv = jax.random.normal(ks[4], (D, D), f32) * s
    w_cls = jax.random.normal(ks[9], (D, num_labels), f32) * s

    p = {
        "word_emb": jax.random.normal(ks[0], (vocab, D), f32) * s,
        "pos_emb": jax.random.normal(ks[1], (max_pos, D), f32) * s,
        "emb_ln_g": jnp.ones((1, D), f32),
        "emb_ln_b": jnp.zeros((1, D), f32),
        # QKV weights fused ONCE at init (bf16 MXU operands).
        "wqkv": jnp.concatenate([wq, wk, wv], axis=1).astype(bf16),
        "bqkv": jnp.zeros((1, 3 * D), f32),
        "wo": (jax.random.normal(ks[5], (D, D), f32) * s).astype(bf16),
        "bo": jnp.zeros((1, D), f32),
        "aln_g": jnp.ones((1, D), f32),
        "aln_b": jnp.zeros((1, D), f32),
        "w1": (jax.random.normal(ks[6], (D, ffn), f32) * s).astype(bf16),
        "b1": jnp.zeros((1, ffn), f32),
        "w2": (jax.random.normal(ks[7], (ffn, D), f32) * s).astype(bf16),
        "b2": jnp.zeros((1, D), f32),
        "fln_g": jnp.ones((1, D), f32),
        "fln_b": jnp.zeros((1, D), f32),
        "wpool": (jax.random.normal(ks[8], (D, D), f32) * s).astype(bf16),
        "bpool": jnp.zeros((1, D), f32),
        # Classifier lane-padded to 128 ONCE at init (lane-dense stores).
        "wcls": jnp.zeros((D, npad), f32).at[:, :num_labels].set(w_cls).astype(bf16),
        "bcls": jnp.zeros((1, npad), f32),
    }
    cfg = dict(hidden=D, heads=heads, num_labels=num_labels, npad=npad)
    return p, cfg


def _resident_spec(arr):
    nd = arr.ndim
    return pl.BlockSpec(arr.shape, lambda b, _nd=nd: (0,) * _nd)


def _per_batch_spec(shape):
    nd = len(shape)
    return pl.BlockSpec((1,) + tuple(shape[1:]),
                        lambda b, _nd=nd: (b,) + (0,) * (_nd - 1))


def my_model_forward(p, cfg, x_ids, mask):
    """Mirrors MyModel.forward: returns (backbone_out, classifier(last_hidden))."""
    B, S = x_ids.shape
    D = cfg["hidden"]
    H = cfg["heads"]
    Dh = D // H
    NL = cfg["num_labels"]
    NPAD = cfg["npad"]

    # Embedding gather is glue (data-dependent rows, no rectangular BlockSpec).
    h_emb = (p["word_emb"][x_ids] + p["pos_emb"][:S][None, :, :]).astype(jnp.float32)
    mask3 = mask.astype(jnp.float32).reshape(B, 1, S)

    weights = (
        p["emb_ln_g"], p["emb_ln_b"],
        p["wqkv"], p["bqkv"],
        p["wo"], p["bo"],
        p["aln_g"], p["aln_b"],
        p["w1"], p["b1"], p["w2"], p["b2"],
        p["fln_g"], p["fln_b"],
        p["wpool"], p["bpool"],
        p["wcls"], p["bcls"],
    )
    inputs = (h_emb, mask3) + weights

    in_specs = [_per_batch_spec(h_emb.shape), _per_batch_spec(mask3.shape)]
    in_specs += [_resident_spec(w) for w in weights]

    out_shapes = (
        jax.ShapeDtypeStruct((B, S, D), jnp.float32),        # last_hidden
        jax.ShapeDtypeStruct((B, 1, D), jnp.float32),        # pooled (CLS)
        jax.ShapeDtypeStruct((B, H, S, S), jnp.float32),     # attention probs
        jax.ShapeDtypeStruct((B, S, NPAD), jnp.float32),     # lane-dense logits
    )
    out_specs = (
        _per_batch_spec((B, S, D)),
        _per_batch_spec((B, 1, D)),
        _per_batch_spec((B, H, S, S)),
        _per_batch_spec((B, S, NPAD)),
    )

    kernel = functools.partial(_fused_kernel, S=S, H=H, Dh=Dh,
                               scale=1.0 / math.sqrt(Dh))

    last_hidden, pooled3, probs, logits_pad = pl.pallas_call(
        kernel,
        out_shape=out_shapes,
        grid=(B,),
        in_specs=in_specs,
        out_specs=out_specs,
        compiler_params=pltpu.CompilerParams(
            dimension_semantics=("parallel",),
            vmem_limit_bytes=64 * 1024 * 1024,
        ),
    )(*inputs)

    logits = logits_pad[:, :, :NL]
    out = BackboneOutput(last_hidden_state=last_hidden,
                         pooler_output=pooled3.reshape(B, D),
                         attentions=(probs,))
    return out, logits


# --------------------------------- main ------------------------------------ #

if __name__ == "__main__":
    key = jax.random.PRNGKey(0)
    pkey, xkey = jax.random.split(key)

    B, S = 2, 8
    params, cfg = init_params(pkey, vocab=100, max_pos=64, hidden=32,
                              heads=2, ffn=64, num_labels=4)

    x_ids = jax.random.randint(xkey, (B, S), 0, 100, dtype=jnp.int32)
    mask = jnp.ones((B, S), jnp.float32).at[:, -2:].set(0.0)  # pad last 2 tokens

    out, logits = my_model_forward(params, cfg, x_ids, mask)
    jax.block_until_ready((logits, out.last_hidden_state,
                           out.pooler_output, out.attentions[0]))

    assert out.last_hidden_state.shape == (B, S, 32)
    assert out.pooler_output.shape == (B, 32)
    assert out.attentions[0].shape == (B, 2, S, S)
    assert logits.shape == (B, S, 4)
    # sanity: softmax rows sum to 1 (exact in-kernel division)
    assert jnp.allclose(jnp.sum(out.attentions[0], axis=-1), 1.0, atol=1e-3)
    # sanity: masked key columns get ~zero attention
    assert float(jnp.max(out.attentions[0][..., -2:])) < 1e-6
    print("KERNEL_OK")
</pallas_src>

<mosaic_0001>
module attributes {stable_mosaic.version = 11 : i64} {
  func.func @_fused_kernel(%arg0: i32, %arg1: memref<1x8x32xf32, #tpu.memory_space<vmem>>, %arg2: memref<1x1x8xf32, #tpu.memory_space<vmem>>, %arg3: memref<1x32xf32, #tpu.memory_space<vmem>>, %arg4: memref<1x32xf32, #tpu.memory_space<vmem>>, %arg5: memref<32x96xbf16, #tpu.memory_space<vmem>>, %arg6: memref<1x96xf32, #tpu.memory_space<vmem>>, %arg7: memref<32x32xbf16, #tpu.memory_space<vmem>>, %arg8: memref<1x32xf32, #tpu.memory_space<vmem>>, %arg9: memref<1x32xf32, #tpu.memory_space<vmem>>, %arg10: memref<1x32xf32, #tpu.memory_space<vmem>>, %arg11: memref<32x64xbf16, #tpu.memory_space<vmem>>, %arg12: memref<1x64xf32, #tpu.memory_space<vmem>>, %arg13: memref<64x32xbf16, #tpu.memory_space<vmem>>, %arg14: memref<1x32xf32, #tpu.memory_space<vmem>>, %arg15: memref<1x32xf32, #tpu.memory_space<vmem>>, %arg16: memref<1x32xf32, #tpu.memory_space<vmem>>, %arg17: memref<32x32xbf16, #tpu.memory_space<vmem>>, %arg18: memref<1x32xf32, #tpu.memory_space<vmem>>, %arg19: memref<32x128xbf16, #tpu.memory_space<vmem>>, %arg20: memref<1x128xf32, #tpu.memory_space<vmem>>, %arg21: memref<1x8x32xf32, #tpu.memory_space<vmem>>, %arg22: memref<1x1x32xf32, #tpu.memory_space<vmem>>, %arg23: memref<1x2x8x8xf32, #tpu.memory_space<vmem>>, %arg24: memref<1x8x128xf32, #tpu.memory_space<vmem>>) attributes {dimension_semantics = [#tpu.dimension_semantics<parallel>], iteration_bounds = array<i64: 2>, scalar_prefetch = 0 : i64, scratch_operands = 0 : i64, tpu.core_type = #tpu.core_type<tc>, window_params = [{transform_indices = @transform_0, window_bounds = array<i64: 1, 8, 32>}, {transform_indices = @transform_1, window_bounds = array<i64: 1, 1, 8>}, {pipeline_mode = #tpu.pipeline_mode<synchronous>, transform_indices = @transform_2, window_bounds = array<i64: 1, 32>}, {pipeline_mode = #tpu.pipeline_mode<synchronous>, transform_indices = @transform_3, window_bounds = array<i64: 1, 32>}, {pipeline_mode = #tpu.pipeline_mode<synchronous>, transform_indices = @transform_4, window_bounds = array<i64: 32, 96>}, {pipeline_mode = #tpu.pipeline_mode<synchronous>, transform_indices = @transform_5, window_bounds = array<i64: 1, 96>}, {pipeline_mode = #tpu.pipeline_mode<synchronous>, transform_indices = @transform_6, window_bounds = array<i64: 32, 32>}, {pipeline_mode = #tpu.pipeline_mode<synchronous>, transform_indices = @transform_7, window_bounds = array<i64: 1, 32>}, {pipeline_mode = #tpu.pipeline_mode<synchronous>, transform_indices = @transform_8, window_bounds = array<i64: 1, 32>}, {pipeline_mode = #tpu.pipeline_mode<synchronous>, transform_indices = @transform_9, window_bounds = array<i64: 1, 32>}, {pipeline_mode = #tpu.pipeline_mode<synchronous>, transform_indices = @transform_10, window_bounds = array<i64: 32, 64>}, {pipeline_mode = #tpu.pipeline_mode<synchronous>, transform_indices = @transform_11, window_bounds = array<i64: 1, 64>}, {pipeline_mode = #tpu.pipeline_mode<synchronous>, transform_indices = @transform_12, window_bounds = array<i64: 64, 32>}, {pipeline_mode = #tpu.pipeline_mode<synchronous>, transform_indices = @transform_13, window_bounds = array<i64: 1, 32>}, {pipeline_mode = #tpu.pipeline_mode<synchronous>, transform_indices = @transform_14, window_bounds = array<i64: 1, 32>}, {pipeline_mode = #tpu.pipeline_mode<synchronous>, transform_indices = @transform_15, window_bounds = array<i64: 1, 32>}, {pipeline_mode = #tpu.pipeline_mode<synchronous>, transform_indices = @transform_16, window_bounds = array<i64: 32, 32>}, {pipeline_mode = #tpu.pipeline_mode<synchronous>, transform_indices = @transform_17, window_bounds = array<i64: 1, 32>}, {pipeline_mode = #tpu.pipeline_mode<synchronous>, transform_indices = @transform_18, window_bounds = array<i64: 32, 128>}, {pipeline_mode = #tpu.pipeline_mode<synchronous>, transform_indices = @transform_19, window_bounds = array<i64: 1, 128>}, {transform_indices = @transform_20, window_bounds = array<i64: 1, 8, 32>}, {transform_indices = @transform_21, window_bounds = array<i64: 1, 1, 32>}, {transform_indices = @transform_22, window_bounds = array<i64: 1, 2, 8, 8>}, {transform_indices = @transform_23, window_bounds = array<i64: 1, 8, 128>}]} {
    %c0 = arith.constant 0 : index
    %c0_0 = arith.constant 0 : index
    %c0_1 = arith.constant 0 : index
    %0 = vector.load %arg1[%c0, %c0_0, %c0_1] : memref<1x8x32xf32, #tpu.memory_space<vmem>>, vector<1x8x32xf32>
    %1 = vector.shape_cast %0 : vector<1x8x32xf32> to vector<8x32xf32>
    %cst = arith.constant dense<0.000000e+00> : vector<8xf32>
    %2 = vector.multi_reduction <add>, %1, %cst [1] : vector<8x32xf32> to vector<8xf32>
    %3 = vector.shape_cast %2 : vector<8xf32> to vector<8x1xf32>
    %cst_2 = arith.constant 3.200000e+01 : f32
    %4 = vector.broadcast %cst_2 : f32 to vector<8x1xf32>
    %5 = arith.divf %3, %4 : vector<8x1xf32>
    %6 = vector.broadcast %5 : vector<8x1xf32> to vector<8x32xf32>
    %7 = arith.subf %1, %6 : vector<8x32xf32>
    %8 = vector.broadcast %5 : vector<8x1xf32> to vector<8x32xf32>
    %9 = arith.subf %1, %8 : vector<8x32xf32>
    %10 = arith.mulf %7, %9 : vector<8x32xf32>
    %cst_3 = arith.constant dense<0.000000e+00> : vector<8xf32>
    %11 = vector.multi_reduction <add>, %10, %cst_3 [1] : vector<8x32xf32> to vector<8xf32>
    %12 = vector.shape_cast %11 : vector<8xf32> to vector<8x1xf32>
    %cst_4 = arith.constant 3.200000e+01 : f32
    %13 = vector.broadcast %cst_4 : f32 to vector<8x1xf32>
    %14 = arith.divf %12, %13 : vector<8x1xf32>
    %15 = vector.broadcast %5 : vector<8x1xf32> to vector<8x32xf32>
    %16 = arith.subf %1, %15 : vector<8x32xf32>
    %cst_5 = arith.constant 9.99999996E-13 : f32
    %17 = vector.broadcast %cst_5 : f32 to vector<8x1xf32>
    %18 = arith.addf %14, %17 : vector<8x1xf32>
    %19 = math.rsqrt %18 : vector<8x1xf32>
    %20 = vector.broadcast %19 : vector<8x1xf32> to vector<8x32xf32>
    %21 = arith.mulf %16, %20 : vector<8x32xf32>
    %c0_6 = arith.constant 0 : index
    %c0_7 = arith.constant 0 : index
    %22 = vector.load %arg3[%c0_6, %c0_7] : memref<1x32xf32, #tpu.memory_space<vmem>>, vector<1x32xf32>
    %23 = vector.broadcast %22 : vector<1x32xf32> to vector<8x32xf32>
    %24 = arith.mulf %21, %23 : vector<8x32xf32>
    %c0_8 = arith.constant 0 : index
    %c0_9 = arith.constant 0 : index
    %25 = vector.load %arg4[%c0_8, %c0_9] : memref<1x32xf32, #tpu.memory_space<vmem>>, vector<1x32xf32>
    %26 = vector.broadcast %25 : vector<1x32xf32> to vector<8x32xf32>
    %27 = arith.addf %24, %26 : vector<8x32xf32>
    %28 = arith.truncf %27 : vector<8x32xf32> to vector<8x32xbf16>
    %c0_10 = arith.constant 0 : index
    %c0_11 = arith.constant 0 : index
    %29 = vector.load %arg5[%c0_10, %c0_11] : memref<32x96xbf16, #tpu.memory_space<vmem>>, vector<32x96xbf16>
    %cst_12 = arith.constant dense<0.000000e+00> : vector<8x96xf32>
    %30 = tpu.matmul %28, %29, %cst_12 {dimension_numbers = #tpu.dot_dimension_numbers<[1], [0], [0], [1], [0, 0, 1, 1], [], []>} : vector<8x32xbf16>, vector<32x96xbf16>, vector<8x96xf32> -> vector<8x96xf32>
    %c0_13 = arith.constant 0 : index
    %c0_14 = arith.constant 0 : index
    %31 = vector.load %arg6[%c0_13, %c0_14] : memref<1x96xf32, #tpu.memory_space<vmem>>, vector<1x96xf32>
    %32 = vector.broadcast %31 : vector<1x96xf32> to vector<8x96xf32>
    %33 = arith.addf %30, %32 : vector<8x96xf32>
    %c0_15 = arith.constant 0 : index
    %c0_16 = arith.constant 0 : index
    %c0_17 = arith.constant 0 : index
    %34 = vector.load %arg2[%c0_15, %c0_16, %c0_17] : memref<1x1x8xf32, #tpu.memory_space<vmem>>, vector<1x1x8xf32>
    %35 = vector.shape_cast %34 : vector<1x1x8xf32> to vector<1x8xf32>
    %cst_18 = arith.constant 1.000000e+00 : f32
    %36 = vector.broadcast %cst_18 : f32 to vector<1x8xf32>
    %37 = arith.subf %36, %35 : vector<1x8xf32>
    %cst_19 = arith.constant -1.000000e+09 : f32
    %38 = vector.broadcast %cst_19 : f32 to vector<1x8xf32>
    %39 = arith.mulf %37, %38 : vector<1x8xf32>
    %cst_20 = arith.constant 0.000000e+00 : f32
    %40 = vector.broadcast %cst_20 : f32 to vector<8x32xf32>
    %c0_21 = arith.constant 0 : index
    %c0_22 = arith.constant 0 : index
    %41 = vector.load %arg7[%c0_21, %c0_22] : memref<32x32xbf16, #tpu.memory_space<vmem>>, vector<32x32xbf16>
    %42 = vector.extract_strided_slice %33 {offsets = [0, 0], sizes = [8, 16], strides = [1, 1]} : vector<8x96xf32> to vector<8x16xf32>
    %43 = arith.truncf %42 : vector<8x16xf32> to vector<8x16xbf16>
    %44 = vector.extract_strided_slice %33 {offsets = [0, 32], sizes = [8, 16], strides = [1, 1]} : vector<8x96xf32> to vector<8x16xf32>
    %45 = arith.truncf %44 : vector<8x16xf32> to vector<8x16xbf16>
    %46 = vector.extract_strided_slice %33 {offsets = [0, 64], sizes = [8, 16], strides = [1, 1]} : vector<8x96xf32> to vector<8x16xf32>
    %47 = arith.truncf %46 : vector<8x16xf32> to vector<8x16xbf16>
    %cst_23 = arith.constant dense<0.000000e+00> : vector<8x8xf32>
    %48 = tpu.matmul %43, %45, %cst_23 {dimension_numbers = #tpu.dot_dimension_numbers<[1], [1], [0], [0], [0, 0, 1, 0], [], []>} : vector<8x16xbf16>, vector<8x16xbf16>, vector<8x8xf32> -> vector<8x8xf32>
    %cst_24 = arith.constant 2.500000e-01 : f32
    %49 = vector.broadcast %cst_24 : f32 to vector<8x8xf32>
    %50 = arith.mulf %48, %49 : vector<8x8xf32>
    %51 = vector.broadcast %39 : vector<1x8xf32> to vector<8x8xf32>
    %52 = arith.addf %50, %51 : vector<8x8xf32>
    %cst_25 = arith.constant dense<0xFF800000> : vector<8xf32>
    %53 = vector.multi_reduction <maximumf>, %52, %cst_25 [1] : vector<8x8xf32> to vector<8xf32>
    %54 = vector.shape_cast %53 : vector<8xf32> to vector<8x1xf32>
    %55 = vector.broadcast %54 : vector<8x1xf32> to vector<8x8xf32>
    %56 = arith.subf %52, %55 : vector<8x8xf32>
    %57 = math.exp %56 : vector<8x8xf32>
    %cst_26 = arith.constant dense<0.000000e+00> : vector<8xf32>
    %58 = vector.multi_reduction <add>, %57, %cst_26 [1] : vector<8x8xf32> to vector<8xf32>
    %59 = vector.shape_cast %58 : vector<8xf32> to vector<8x1xf32>
    %60 = vector.broadcast %59 : vector<8x1xf32> to vector<8x8xf32>
    %61 = arith.divf %57, %60 : vector<8x8xf32>
    %c0_27 = arith.constant 0 : index
    %c0_28 = arith.constant 0 : index
    %c0_29 = arith.constant 0 : index
    %c0_30 = arith.constant 0 : index
    %62 = vector.load %arg23[%c0_27, %c0_28, %c0_29, %c0_30] : memref<1x2x8x8xf32, #tpu.memory_space<vmem>>, vector<1x1x8x8xf32>
    %63 = vector.shape_cast %62 : vector<1x1x8x8xf32> to vector<8x8xf32>
    %64 = vector.shape_cast %61 : vector<8x8xf32> to vector<1x1x8x8xf32>
    tpu.vector_store %arg23[%c0_27, %c0_28, %c0_29, %c0_30], %64 {strides = array<i32>} : memref<1x2x8x8xf32, #tpu.memory_space<vmem>>, vector<1x1x8x8xf32>,
    %65 = arith.truncf %61 : vector<8x8xf32> to vector<8x8xbf16>
    %cst_31 = arith.constant dense<0.000000e+00> : vector<8x16xf32>
    %66 = tpu.matmul %65, %47, %cst_31 {dimension_numbers = #tpu.dot_dimension_numbers<[1], [0], [0], [1], [0, 0, 1, 1], [], []>} : vector<8x8xbf16>, vector<8x16xbf16>, vector<8x16xf32> -> vector<8x16xf32>
    %67 = arith.truncf %66 : vector<8x16xf32> to vector<8x16xbf16>
    %68 = vector.extract_strided_slice %41 {offsets = [0, 0], sizes = [16, 32], strides = [1, 1]} : vector<32x32xbf16> to vector<16x32xbf16>
    %cst_32 = arith.constant dense<0.000000e+00> : vector<8x32xf32>
    %69 = tpu.matmul %67, %68, %cst_32 {dimension_numbers = #tpu.dot_dimension_numbers<[1], [0], [0], [1], [0, 0, 1, 1], [], []>} : vector<8x16xbf16>, vector<16x32xbf16>, vector<8x32xf32> -> vector<8x32xf32>
    %70 = arith.addf %40, %69 : vector<8x32xf32>
    %71 = vector.extract_strided_slice %33 {offsets = [0, 16], sizes = [8, 16], strides = [1, 1]} : vector<8x96xf32> to vector<8x16xf32>
    %72 = arith.truncf %71 : vector<8x16xf32> to vector<8x16xbf16>
    %73 = vector.extract_strided_slice %33 {offsets = [0, 48], sizes = [8, 16], strides = [1, 1]} : vector<8x96xf32> to vector<8x16xf32>
    %74 = arith.truncf %73 : vector<8x16xf32> to vector<8x16xbf16>
    %75 = vector.extract_strided_slice %33 {offsets = [0, 80], sizes = [8, 16], strides = [1, 1]} : vector<8x96xf32> to vector<8x16xf32>
    %76 = arith.truncf %75 : vector<8x16xf32> to vector<8x16xbf16>
    %cst_33 = arith.constant dense<0.000000e+00> : vector<8x8xf32>
    %77 = tpu.matmul %72, %74, %cst_33 {dimension_numbers = #tpu.dot_dimension_numbers<[1], [1], [0], [0], [0, 0, 1, 0], [], []>} : vector<8x16xbf16>, vector<8x16xbf16>, vector<8x8xf32> -> vector<8x8xf32>
    %cst_34 = arith.constant 2.500000e-01 : f32
    %78 = vector.broadcast %cst_34 : f32 to vector<8x8xf32>
    %79 = arith.mulf %77, %78 : vector<8x8xf32>
    %80 = vector.broadcast %39 : vector<1x8xf32> to vector<8x8xf32>
    %81 = arith.addf %79, %80 : vector<8x8xf32>
    %cst_35 = arith.constant dense<0xFF800000> : vector<8xf32>
    %82 = vector.multi_reduction <maximumf>, %81, %cst_35 [1] : vector<8x8xf32> to vector<8xf32>
    %83 = vector.shape_cast %82 : vector<8xf32> to vector<8x1xf32>
    %84 = vector.broadcast %83 : vector<8x1xf32> to vector<8x8xf32>
    %85 = arith.subf %81, %84 : vector<8x8xf32>
    %86 = math.exp %85 : vector<8x8xf32>
    %cst_36 = arith.constant dense<0.000000e+00> : vector<8xf32>
    %87 = vector.multi_reduction <add>, %86, %cst_36 [1] : vector<8x8xf32> to vector<8xf32>
    %88 = vector.shape_cast %87 : vector<8xf32> to vector<8x1xf32>
    %89 = vector.broadcast %88 : vector<8x1xf32> to vector<8x8xf32>
    %90 = arith.divf %86, %89 : vector<8x8xf32>
    %c0_37 = arith.constant 0 : index
    %c1 = arith.constant 1 : index
    %c0_38 = arith.constant 0 : index
    %c0_39 = arith.constant 0 : index
    %91 = vector.load %arg23[%c0_37, %c1, %c0_38, %c0_39] : memref<1x2x8x8xf32, #tpu.memory_space<vmem>>, vector<1x1x8x8xf32>
    %92 = vector.shape_cast %91 : vector<1x1x8x8xf32> to vector<8x8xf32>
    %93 = vector.shape_cast %90 : vector<8x8xf32> to vector<1x1x8x8xf32>
    tpu.vector_store %arg23[%c0_37, %c1, %c0_38, %c0_39], %93 {strides = array<i32>} : memref<1x2x8x8xf32, #tpu.memory_space<vmem>>, vector<1x1x8x8xf32>,
    %94 = arith.truncf %90 : vector<8x8xf32> to vector<8x8xbf16>
    %cst_40 = arith.constant dense<0.000000e+00> : vector<8x16xf32>
    %95 = tpu.matmul %94, %76, %cst_40 {dimension_numbers = #tpu.dot_dimension_numbers<[1], [0], [0], [1], [0, 0, 1, 1], [], []>} : vector<8x8xbf16>, vector<8x16xbf16>, vector<8x16xf32> -> vector<8x16xf32>
    %96 = arith.truncf %95 : vector<8x16xf32> to vector<8x16xbf16>
    %97 = vector.extract_strided_slice %41 {offsets = [16, 0], sizes = [16, 32], strides = [1, 1]} : vector<32x32xbf16> to vector<16x32xbf16>
    %cst_41 = arith.constant dense<0.000000e+00> : vector<8x32xf32>
    %98 = tpu.matmul %96, %97, %cst_41 {dimension_numbers = #tpu.dot_dimension_numbers<[1], [0], [0], [1], [0, 0, 1, 1], [], []>} : vector<8x16xbf16>, vector<16x32xbf16>, vector<8x32xf32> -> vector<8x32xf32>
    %99 = arith.addf %70, %98 : vector<8x32xf32>
    %c0_42 = arith.constant 0 : index
    %c0_43 = arith.constant 0 : index
    %100 = vector.load %arg8[%c0_42, %c0_43] : memref<1x32xf32, #tpu.memory_space<vmem>>, vector<1x32xf32>
    %101 = vector.broadcast %100 : vector<1x32xf32> to vector<8x32xf32>
    %102 = arith.addf %99, %101 : vector<8x32xf32>
    %103 = arith.addf %102, %27 : vector<8x32xf32>
    %cst_44 = arith.constant dense<0.000000e+00> : vector<8xf32>
    %104 = vector.multi_reduction <add>, %103, %cst_44 [1] : vector<8x32xf32> to vector<8xf32>
    %105 = vector.shape_cast %104 : vector<8xf32> to vector<8x1xf32>
    %cst_45 = arith.constant 3.200000e+01 : f32
    %106 = vector.broadcast %cst_45 : f32 to vector<8x1xf32>
    %107 = arith.divf %105, %106 : vector<8x1xf32>
    %108 = vector.broadcast %107 : vector<8x1xf32> to vector<8x32xf32>
    %109 = arith.subf %103, %108 : vector<8x32xf32>
    %110 = vector.broadcast %107 : vector<8x1xf32> to vector<8x32xf32>
    %111 = arith.subf %103, %110 : vector<8x32xf32>
    %112 = arith.mulf %109, %111 : vector<8x32xf32>
    %cst_46 = arith.constant dense<0.000000e+00> : vector<8xf32>
    %113 = vector.multi_reduction <add>, %112, %cst_46 [1] : vector<8x32xf32> to vector<8xf32>
    %114 = vector.shape_cast %113 : vector<8xf32> to vector<8x1xf32>
    %cst_47 = arith.constant 3.200000e+01 : f32
    %115 = vector.broadcast %cst_47 : f32 to vector<8x1xf32>
    %116 = arith.divf %114, %115 : vector<8x1xf32>
    %117 = vector.broadcast %107 : vector<8x1xf32> to vector<8x32xf32>
    %118 = arith.subf %103, %117 : vector<8x32xf32>
    %cst_48 = arith.constant 9.99999996E-13 : f32
    %119 = vector.broadcast %cst_48 : f32 to vector<8x1xf32>
    %120 = arith.addf %116, %119 : vector<8x1xf32>
    %121 = math.rsqrt %120 : vector<8x1xf32>
    %122 = vector.broadcast %121 : vector<8x1xf32> to vector<8x32xf32>
    %123 = arith.mulf %118, %122 : vector<8x32xf32>
    %c0_49 = arith.constant 0 : index
    %c0_50 = arith.constant 0 : index
    %124 = vector.load %arg9[%c0_49, %c0_50] : memref<1x32xf32, #tpu.memory_space<vmem>>, vector<1x32xf32>
    %125 = vector.broadcast %124 : vector<1x32xf32> to vector<8x32xf32>
    %126 = arith.mulf %123, %125 : vector<8x32xf32>
    %c0_51 = arith.constant 0 : index
    %c0_52 = arith.constant 0 : index
    %127 = vector.load %arg10[%c0_51, %c0_52] : memref<1x32xf32, #tpu.memory_space<vmem>>, vector<1x32xf32>
    %128 = vector.broadcast %127 : vector<1x32xf32> to vector<8x32xf32>
    %129 = arith.addf %126, %128 : vector<8x32xf32>
    %130 = arith.truncf %129 : vector<8x32xf32> to vector<8x32xbf16>
    %c0_53 = arith.constant 0 : index
    %c0_54 = arith.constant 0 : index
    %131 = vector.load %arg11[%c0_53, %c0_54] : memref<32x64xbf16, #tpu.memory_space<vmem>>, vector<32x64xbf16>
    %cst_55 = arith.constant dense<0.000000e+00> : vector<8x64xf32>
    %132 = tpu.matmul %130, %131, %cst_55 {dimension_numbers = #tpu.dot_dimension_numbers<[1], [0], [0], [1], [0, 0, 1, 1], [], []>} : vector<8x32xbf16>, vector<32x64xbf16>, vector<8x64xf32> -> vector<8x64xf32>
    %c0_56 = arith.constant 0 : index
    %c0_57 = arith.constant 0 : index
    %133 = vector.load %arg12[%c0_56, %c0_57] : memref<1x64xf32, #tpu.memory_space<vmem>>, vector<1x64xf32>
    %134 = vector.broadcast %133 : vector<1x64xf32> to vector<8x64xf32>
    %135 = arith.addf %132, %134 : vector<8x64xf32>
    %cst_58 = arith.constant 5.000000e-01 : f32
    %136 = vector.broadcast %cst_58 : f32 to vector<8x64xf32>
    %137 = arith.mulf %136, %135 : vector<8x64xf32>
    %cst_59 = arith.constant 4.471500e-02 : f32
    %138 = vector.broadcast %cst_59 : f32 to vector<8x64xf32>
    %139 = arith.mulf %138, %135 : vector<8x64xf32>
    %140 = arith.mulf %139, %135 : vector<8x64xf32>
    %141 = arith.mulf %140, %135 : vector<8x64xf32>
    %142 = arith.addf %135, %141 : vector<8x64xf32>
    %cst_60 = arith.constant 0.797884583 : f32
    %143 = vector.broadcast %cst_60 : f32 to vector<8x64xf32>
    %144 = arith.mulf %143, %142 : vector<8x64xf32>
    %145 = math.tanh %144 : vector<8x64xf32>
    %cst_61 = arith.constant 1.000000e+00 : f32
    %146 = vector.broadcast %cst_61 : f32 to vector<8x64xf32>
    %147 = arith.addf %146, %145 : vector<8x64xf32>
    %148 = arith.mulf %137, %147 : vector<8x64xf32>
    %149 = arith.truncf %148 : vector<8x64xf32> to vector<8x64xbf16>
    %c0_62 = arith.constant 0 : index
    %c0_63 = arith.constant 0 : index
    %150 = vector.load %arg13[%c0_62, %c0_63] : memref<64x32xbf16, #tpu.memory_space<vmem>>, vector<64x32xbf16>
    %cst_64 = arith.constant dense<0.000000e+00> : vector<8x32xf32>
    %151 = tpu.matmul %149, %150, %cst_64 {dimension_numbers = #tpu.dot_dimension_numbers<[1], [0], [0], [1], [0, 0, 1, 1], [], []>} : vector<8x64xbf16>, vector<64x32xbf16>, vector<8x32xf32> -> vector<8x32xf32>
    %c0_65 = arith.constant 0 : index
    %c0_66 = arith.constant 0 : index
    %152 = vector.load %arg14[%c0_65, %c0_66] : memref<1x32xf32, #tpu.memory_space<vmem>>, vector<1x32xf32>
    %153 = vector.broadcast %152 : vector<1x32xf32> to vector<8x32xf32>
    %154 = arith.addf %151, %153 : vector<8x32xf32>
    %155 = arith.addf %154, %129 : vector<8x32xf32>
    %cst_67 = arith.constant dense<0.000000e+00> : vector<8xf32>
    %156 = vector.multi_reduction <add>, %155, %cst_67 [1] : vector<8x32xf32> to vector<8xf32>
    %157 = vector.shape_cast %156 : vector<8xf32> to vector<8x1xf32>
    %cst_68 = arith.constant 3.200000e+01 : f32
    %158 = vector.broadcast %cst_68 : f32 to vector<8x1xf32>
    %159 = arith.divf %157, %158 : vector<8x1xf32>
    %160 = vector.broadcast %159 : vector<8x1xf32> to vector<8x32xf32>
    %161 = arith.subf %155, %160 : vector<8x32xf32>
    %162 = vector.broadcast %159 : vector<8x1xf32> to vector<8x32xf32>
    %163 = arith.subf %155, %162 : vector<8x32xf32>
    %164 = arith.mulf %161, %163 : vector<8x32xf32>
    %cst_69 = arith.constant dense<0.000000e+00> : vector<8xf32>
    %165 = vector.multi_reduction <add>, %164, %cst_69 [1] : vector<8x32xf32> to vector<8xf32>
    %166 = vector.shape_cast %165 : vector<8xf32> to vector<8x1xf32>
    %cst_70 = arith.constant 3.200000e+01 : f32
    %167 = vector.broadcast %cst_70 : f32 to vector<8x1xf32>
    %168 = arith.divf %166, %167 : vector<8x1xf32>
    %169 = vector.broadcast %159 : vector<8x1xf32> to vector<8x32xf32>
    %170 = arith.subf %155, %169 : vector<8x32xf32>
    %cst_71 = arith.constant 9.99999996E-13 : f32
    %171 = vector.broadcast %cst_71 : f32 to vector<8x1xf32>
    %172 = arith.addf %168, %171 : vector<8x1xf32>
    %173 = math.rsqrt %172 : vector<8x1xf32>
    %174 = vector.broadcast %173 : vector<8x1xf32> to vector<8x32xf32>
    %175 = arith.mulf %170, %174 : vector<8x32xf32>
    %c0_72 = arith.constant 0 : index
    %c0_73 = arith.constant 0 : index
    %176 = vector.load %arg15[%c0_72, %c0_73] : memref<1x32xf32, #tpu.memory_space<vmem>>, vector<1x32xf32>
    %177 = vector.broadcast %176 : vector<1x32xf32> to vector<8x32xf32>
    %178 = arith.mulf %175, %177 : vector<8x32xf32>
    %c0_74 = arith.constant 0 : index
    %c0_75 = arith.constant 0 : index
    %179 = vector.load %arg16[%c0_74, %c0_75] : memref<1x32xf32, #tpu.memory_space<vmem>>, vector<1x32xf32>
    %180 = vector.broadcast %179 : vector<1x32xf32> to vector<8x32xf32>
    %181 = arith.addf %178, %180 : vector<8x32xf32>
    %c0_76 = arith.constant 0 : index
    %c0_77 = arith.constant 0 : index
    %c0_78 = arith.constant 0 : index
    %182 = vector.load %arg21[%c0_76, %c0_77, %c0_78] : memref<1x8x32xf32, #tpu.memory_space<vmem>>, vector<1x8x32xf32>
    %183 = vector.shape_cast %182 : vector<1x8x32xf32> to vector<8x32xf32>
    %184 = vector.shape_cast %181 : vector<8x32xf32> to vector<1x8x32xf32>
    tpu.vector_store %arg21[%c0_76, %c0_77, %c0_78], %184 {strides = array<i32>} : memref<1x8x32xf32, #tpu.memory_space<vmem>>, vector<1x8x32xf32>,
    %185 = vector.extract_strided_slice %181 {offsets = [0, 0], sizes = [1, 32], strides = [1, 1]} : vector<8x32xf32> to vector<1x32xf32>
    %186 = arith.truncf %185 : vector<1x32xf32> to vector<1x32xbf16>
    %c0_79 = arith.constant 0 : index
    %c0_80 = arith.constant 0 : index
    %187 = vector.load %arg17[%c0_79, %c0_80] : memref<32x32xbf16, #tpu.memory_space<vmem>>, vector<32x32xbf16>
    %cst_81 = arith.constant dense<0.000000e+00> : vector<1x32xf32>
    %188 = tpu.matmul %186, %187, %cst_81 {dimension_numbers = #tpu.dot_dimension_numbers<[1], [0], [0], [1], [0, 0, 1, 1], [], []>} : vector<1x32xbf16>, vector<32x32xbf16>, vector<1x32xf32> -> vector<1x32xf32>
    %c0_82 = arith.constant 0 : index
    %c0_83 = arith.constant 0 : index
    %189 = vector.load %arg18[%c0_82, %c0_83] : memref<1x32xf32, #tpu.memory_space<vmem>>, vector<1x32xf32>
    %190 = arith.addf %188, %189 : vector<1x32xf32>
    %191 = math.tanh %190 : vector<1x32xf32>
    %c0_84 = arith.constant 0 : index
    %c0_85 = arith.constant 0 : index
    %c0_86 = arith.constant 0 : index
    %192 = vector.load %arg22[%c0_84, %c0_85, %c0_86] : memref<1x1x32xf32, #tpu.memory_space<vmem>>, vector<1x1x32xf32>
    %193 = vector.shape_cast %192 : vector<1x1x32xf32> to vector<1x32xf32>
    %194 = vector.shape_cast %191 : vector<1x32xf32> to vector<1x1x32xf32>
    tpu.vector_store %arg22[%c0_84, %c0_85, %c0_86], %194 {strides = array<i32>} : memref<1x1x32xf32, #tpu.memory_space<vmem>>, vector<1x1x32xf32>,
    %195 = arith.truncf %181 : vector<8x32xf32> to vector<8x32xbf16>
    %c0_87 = arith.constant 0 : index
    %c0_88 = arith.constant 0 : index
    %196 = vector.load %arg19[%c0_87, %c0_88] : memref<32x128xbf16, #tpu.memory_space<vmem>>, vector<32x128xbf16>
    %cst_89 = arith.constant dense<0.000000e+00> : vector<8x128xf32>
    %197 = tpu.matmul %195, %196, %cst_89 {dimension_numbers = #tpu.dot_dimension_numbers<[1], [0], [0], [1], [0, 0, 1, 1], [], []>} : vector<8x32xbf16>, vector<32x128xbf16>, vector<8x128xf32> -> vector<8x128xf32>
    %c0_90 = arith.constant 0 : index
    %c0_91 = arith.constant 0 : index
    %198 = vector.load %arg20[%c0_90, %c0_91] : memref<1x128xf32, #tpu.memory_space<vmem>>, vector<1x128xf32>
    %199 = vector.broadcast %198 : vector<1x128xf32> to vector<8x128xf32>
    %200 = arith.addf %197, %199 : vector<8x128xf32>
    %c0_92 = arith.constant 0 : index
    %c0_93 = arith.constant 0 : index
    %c0_94 = arith.constant 0 : index
    %201 = vector.load %arg24[%c0_92, %c0_93, %c0_94] : memref<1x8x128xf32, #tpu.memory_space<vmem>>, vector<1x8x128xf32>
    %202 = vector.shape_cast %201 : vector<1x8x128xf32> to vector<8x128xf32>
    %203 = vector.shape_cast %200 : vector<8x128xf32> to vector<1x8x128xf32>
    tpu.vector_store %arg24[%c0_92, %c0_93, %c0_94], %203 {strides = array<i32>} : memref<1x8x128xf32, #tpu.memory_space<vmem>>, vector<1x8x128xf32>,
    return
  }
  func.func @transform_0(%arg0: i32) -> (i32, i32, i32) {
    %c0_i32 = arith.constant 0 : i32
    %c0_i32_0 = arith.constant 0 : i32
    %c0_i32_1 = arith.constant 0 : i32
    return %arg0, %c0_i32, %c0_i32_0 : i32, i32, i32
  }
  func.func @transform_1(%arg0: i32) -> (i32, i32, i32) {
    %c0_i32 = arith.constant 0 : i32
    %c0_i32_0 = arith.constant 0 : i32
    %c0_i32_1 = arith.constant 0 : i32
    return %arg0, %c0_i32, %c0_i32_0 : i32, i32, i32
  }
  func.func @transform_2(%arg0: i32) -> (i32, i32) {
    %c0_i32 = arith.constant 0 : i32
    %c0_i32_0 = arith.constant 0 : i32
    %c0_i32_1 = arith.constant 0 : i32
    return %c0_i32, %c0_i32_0 : i32, i32
  }
  func.func @transform_3(%arg0: i32) -> (i32, i32) {
    %c0_i32 = arith.constant 0 : i32
    %c0_i32_0 = arith.constant 0 : i32
    %c0_i32_1 = arith.constant 0 : i32
    return %c0_i32, %c0_i32_0 : i32, i32
  }
  func.func @transform_4(%arg0: i32) -> (i32, i32) {
    %c0_i32 = arith.constant 0 : i32
    %c0_i32_0 = arith.constant 0 : i32
    %c0_i32_1 = arith.constant 0 : i32
    return %c0_i32, %c0_i32_0 : i32, i32
  }
  func.func @transform_5(%arg0: i32) -> (i32, i32) {
    %c0_i32 = arith.constant 0 : i32
    %c0_i32_0 = arith.constant 0 : i32
    %c0_i32_1 = arith.constant 0 : i32
    return %c0_i32, %c0_i32_0 : i32, i32
  }
  func.func @transform_6(%arg0: i32) -> (i32, i32) {
    %c0_i32 = arith.constant 0 : i32
    %c0_i32_0 = arith.constant 0 : i32
    %c0_i32_1 = arith.constant 0 : i32
    return %c0_i32, %c0_i32_0 : i32, i32
  }
  func.func @transform_7(%arg0: i32) -> (i32, i32) {
    %c0_i32 = arith.constant 0 : i32
    %c0_i32_0 = arith.constant 0 : i32
    %c0_i32_1 = arith.constant 0 : i32
    return %c0_i32, %c0_i32_0 : i32, i32
  }
  func.func @transform_8(%arg0: i32) -> (i32, i32) {
    %c0_i32 = arith.constant 0 : i32
    %c0_i32_0 = arith.constant 0 : i32
    %c0_i32_1 = arith.constant 0 : i32
    return %c0_i32, %c0_i32_0 : i32, i32
  }
  func.func @transform_9(%arg0: i32) -> (i32, i32) {
    %c0_i32 = arith.constant 0 : i32
    %c0_i32_0 = arith.constant 0 : i32
    %c0_i32_1 = arith.constant 0 : i32
    return %c0_i32, %c0_i32_0 : i32, i32
  }
  func.func @transform_10(%arg0: i32) -> (i32, i32) {
    %c0_i32 = arith.constant 0 : i32
    %c0_i32_0 = arith.constant 0 : i32
    %c0_i32_1 = arith.constant 0 : i32
    return %c0_i32, %c0_i32_0 : i32, i32
  }
  func.func @transform_11(%arg0: i32) -> (i32, i32) {
    %c0_i32 = arith.constant 0 : i32
    %c0_i32_0 = arith.constant 0 : i32
    %c0_i32_1 = arith.constant 0 : i32
    return %c0_i32, %c0_i32_0 : i32, i32
  }
  func.func @transform_12(%arg0: i32) -> (i32, i32) {
    %c0_i32 = arith.constant 0 : i32
    %c0_i32_0 = arith.constant 0 : i32
    %c0_i32_1 = arith.constant 0 : i32
    return %c0_i32, %c0_i32_0 : i32, i32
  }
  func.func @transform_13(%arg0: i32) -> (i32, i32) {
    %c0_i32 = arith.constant 0 : i32
    %c0_i32_0 = arith.constant 0 : i32
    %c0_i32_1 = arith.constant 0 : i32
    return %c0_i32, %c0_i32_0 : i32, i32
  }
  func.func @transform_14(%arg0: i32) -> (i32, i32) {
    %c0_i32 = arith.constant 0 : i32
    %c0_i32_0 = arith.constant 0 : i32
    %c0_i32_1 = arith.constant 0 : i32
    return %c0_i32, %c0_i32_0 : i32, i32
  }
  func.func @transform_15(%arg0: i32) -> (i32, i32) {
    %c0_i32 = arith.constant 0 : i32
    %c0_i32_0 = arith.constant 0 : i32
    %c0_i32_1 = arith.constant 0 : i32
    return %c0_i32, %c0_i32_0 : i32, i32
  }
  func.func @transform_16(%arg0: i32) -> (i32, i32) {
    %c0_i32 = arith.constant 0 : i32
    %c0_i32_0 = arith.constant 0 : i32
    %c0_i32_1 = arith.constant 0 : i32
    return %c0_i32, %c0_i32_0 : i32, i32
  }
  func.func @transform_17(%arg0: i32) -> (i32, i32) {
    %c0_i32 = arith.constant 0 : i32
    %c0_i32_0 = arith.constant 0 : i32
    %c0_i32_1 = arith.constant 0 : i32
    return %c0_i32, %c0_i32_0 : i32, i32
  }
  func.func @transform_18(%arg0: i32) -> (i32, i32) {
    %c0_i32 = arith.constant 0 : i32
    %c0_i32_0 = arith.constant 0 : i32
    %c0_i32_1 = arith.constant 0 : i32
    return %c0_i32, %c0_i32_0 : i32, i32
  }
  func.func @transform_19(%arg0: i32) -> (i32, i32) {
    %c0_i32 = arith.constant 0 : i32
    %c0_i32_0 = arith.constant 0 : i32
    %c0_i32_1 = arith.constant 0 : i32
    return %c0_i32, %c0_i32_0 : i32, i32
  }
  func.func @transform_20(%arg0: i32) -> (i32, i32, i32) {
    %c0_i32 = arith.constant 0 : i32
    %c0_i32_0 = arith.constant 0 : i32
    %c0_i32_1 = arith.constant 0 : i32
    return %arg0, %c0_i32, %c0_i32_0 : i32, i32, i32
  }
  func.func @transform_21(%arg0: i32) -> (i32, i32, i32) {
    %c0_i32 = arith.constant 0 : i32
    %c0_i32_0 = arith.constant 0 : i32
    %c0_i32_1 = arith.constant 0 : i32
    return %arg0, %c0_i32, %c0_i32_0 : i32, i32, i32
  }
  func.func @transform_22(%arg0: i32) -> (i32, i32, i32, i32) {
    %c0_i32 = arith.constant 0 : i32
    %c0_i32_0 = arith.constant 0 : i32
    %c0_i32_1 = arith.constant 0 : i32
    %c0_i32_2 = arith.constant 0 : i32
    return %arg0, %c0_i32, %c0_i32_0, %c0_i32_1 : i32, i32, i32, i32
  }
  func.func @transform_23(%arg0: i32) -> (i32, i32, i32) {
    %c0_i32 = arith.constant 0 : i32
    %c0_i32_0 = arith.constant 0 : i32
    %c0_i32_1 = arith.constant 0 : i32
    return %arg0, %c0_i32, %c0_i32_0 : i32, i32, i32
  }
}

</mosaic_0001>

<llo_original>
// kernel: tpu_custom_call.1
$region0: #{tpu_custom_call.1}
  #allocation0 [shape = 'u32[]', space=smem, size = 0x4, offset = 0x4, fixed_abs, tag = 'smem constant byte address 0x4 - core index']
  #allocation1 [shape = 'u32[72,128]{1,0:T(1,128)}', space=vmem, size = 0x9000, scoped, tag = 'internal scratch']
  %s0 = inlined_call_operand.vmem [shape: f32[2,8,32], index: 0, kind: input, shape index: {}]
  %s1 = inlined_call_operand.hbm [shape: f32[2,1,8], index: 1, kind: input, shape index: {}]
  %s2 = inlined_call_operand.hbm [shape: f32[1,32], index: 2, kind: input, shape index: {}]
  %s3 = inlined_call_operand.hbm [shape: f32[1,32], index: 3, kind: input, shape index: {}]
  %s4 = inlined_call_operand.vmem [shape: bf16[32,96], index: 4, kind: input, shape index: {}]
  %s5 = inlined_call_operand.hbm [shape: f32[1,96], index: 5, kind: input, shape index: {}]
  %s6 = inlined_call_operand.vmem [shape: bf16[32,32], index: 6, kind: input, shape index: {}]
  %s7 = inlined_call_operand.hbm [shape: f32[1,32], index: 7, kind: input, shape index: {}]
  %s8 = inlined_call_operand.hbm [shape: f32[1,32], index: 8, kind: input, shape index: {}]
  %s9 = inlined_call_operand.hbm [shape: f32[1,32], index: 9, kind: input, shape index: {}]
  %s10 = inlined_call_operand.hbm [shape: bf16[32,64], index: 10, kind: input, shape index: {}]
  %s11 = inlined_call_operand.hbm [shape: f32[1,64], index: 11, kind: input, shape index: {}]
  %s12 = inlined_call_operand.vmem [shape: bf16[64,32], index: 12, kind: input, shape index: {}]
  %s13 = inlined_call_operand.hbm [shape: f32[1,32], index: 13, kind: input, shape index: {}]
  %s14 = inlined_call_operand.hbm [shape: f32[1,32], index: 14, kind: input, shape index: {}]
  %s15 = inlined_call_operand.hbm [shape: f32[1,32], index: 15, kind: input, shape index: {}]
  %s16 = inlined_call_operand.hbm [shape: bf16[32,32], index: 16, kind: input, shape index: {}]
  %s17 = inlined_call_operand.hbm [shape: f32[1,32], index: 17, kind: input, shape index: {}]
  %s18 = inlined_call_operand.vmem [shape: bf16[32,128], index: 18, kind: input, shape index: {}]
  %s19 = inlined_call_operand.vmem [shape: f32[1,128], index: 19, kind: input, shape index: {}]
  %s20 = inlined_call_operand.hbm [shape: f32[2,8,32], index: 20, kind: output, shape index: {0}]
  %s21 = inlined_call_operand.hbm [shape: f32[2,1,32], index: 21, kind: output, shape index: {1}]
  %s22 = inlined_call_operand.hbm [shape: f32[2,2,8,8], index: 22, kind: output, shape index: {2}]
  %s23 = inlined_call_operand.hbm [shape: f32[2,8,128], index: 23, kind: output, shape index: {3}]
  %24 = xla_tuple %s20, %s21, %s22, %s23
  %s25 = sld [smem:[#allocation0]]
  $region193: #{tpu_custom_call.1} parent=0
    _
  %s27 = ssub.s32 1, %s25
  %s28 = scalar_select 0, %s27, %s25
  $region1: #{tpu_custom_call.1} parent=0
    #allocation2 [shape = 'u8[1024]{0}', space=vmem, size = 0x400, scoped, tag = 'input window, operand 1']
    #allocation3 [shape = 's32[2]{0}', space=sflag, size = 0x8, scoped, tag = 'scoped memory for tpu_custom_call.1']
    #allocation4 [shape = 's32[2]{0}', space=sflag, size = 0x8, scoped, tag = 'scoped memory for tpu_custom_call.1']
    #allocation5 [shape = 'u8[512]{0}', space=vmem, size = 0x400, scoped, tag = 'input window, operand 2, single buffered']
    #allocation6 [shape = 's32[1]{0}', space=sflag, size = 0x4, scoped, tag = 'scoped memory for tpu_custom_call.1']
    #allocation7 [shape = 'u8[512]{0}', space=vmem, size = 0x400, scoped, tag = 'input window, operand 3, single buffered']
    #allocation8 [shape = 'u8[512]{0}', space=vmem, size = 0x400, scoped, tag = 'input window, operand 5, single buffered']
    #allocation9 [shape = 's32[1]{0}', space=sflag, size = 0x4, scoped, tag = 'scoped memory for tpu_custom_call.1']
    #allocation10 [shape = 'u8[512]{0}', space=vmem, size = 0x400, scoped, tag = 'input window, operand 7, single buffered']
    #allocation11 [shape = 'u8[512]{0}', space=vmem, size = 0x400, scoped, tag = 'input window, operand 8, single buffered']
    #allocation12 [shape = 's32[1]{0}', space=sflag, size = 0x4, scoped, tag = 'scoped memory for tpu_custom_call.1']
    #allocation13 [shape = 'u8[512]{0}', space=vmem, size = 0x400, scoped, tag = 'input window, operand 9, single buffered']
    #allocation14 [shape = 'u8[8192]{0}', space=vmem, size = 0x2000, scoped, tag = 'input window, operand 10, single buffered']
    #allocation15 [shape = 's32[1]{0}', space=sflag, size = 0x4, scoped, tag = 'scoped memory for tpu_custom_call.1']
    #allocation16 [shape = 'u8[512]{0}', space=vmem, size = 0x400, scoped, tag = 'input window, operand 11, single buffered']
    #allocation17 [shape = 'u8[512]{0}', space=vmem, size = 0x400, scoped, tag = 'input window, operand 13, single buffered']
    #allocation18 [shape = 's32[1]{0}', space=sflag, size = 0x4, scoped, tag = 'scoped memory for tpu_custom_call.1']
    #allocation19 [shape = 'u8[512]{0}', space=vmem, size = 0x400, scoped, tag = 'input window, operand 14, single buffered']
    #allocation20 [shape = 'u8[512]{0}', space=vmem, size = 0x400, scoped, tag = 'input window, operand 15, single buffered']
    #allocation21 [shape = 's32[1]{0}', space=sflag, size = 0x4, scoped, tag = 'scoped memory for tpu_custom_call.1']
    #allocation22 [shape = 'u8[8192]{0}', space=vmem, size = 0x2000, scoped, tag = 'input window, operand 16, single buffered']
    #allocation23 [shape = 'u8[512]{0}', space=vmem, size = 0x400, scoped, tag = 'input window, operand 17, single buffered']
    #allocation24 [shape = 's32[1]{0}', space=sflag, size = 0x4, scoped, tag = 'scoped memory for tpu_custom_call.1']
    #allocation25 [shape = 'u8[8192]{0}', space=vmem, size = 0x2000, scoped, tag = 'output window, operand 0']
    #allocation26 [shape = 'u8[1024]{0}', space=vmem, size = 0x400, scoped, tag = 'output window, operand 1']
    #allocation27 [shape = 's32[2]{0}', space=sflag, size = 0x8, scoped, tag = 'scoped memory for tpu_custom_call.1']
    #allocation28 [shape = 'u8[16384]{0}', space=vmem, size = 0x4000, scoped, tag = 'output window, operand 2']
    #allocation29 [shape = 'u8[8192]{0}', space=vmem, size = 0x2000, scoped, tag = 'output window, operand 3']
    #allocation30 [shape = 's32[2]{0}', space=sflag, size = 0x8, scoped, tag = 'scoped memory for tpu_custom_call.1']
    %29 = vsyncpa [#allocation3], 0
    %s30 = scalar_lea.sflag [#allocation3], 1
    %31 = vsyncpa %s30, 0
    %32 = vsyncpa [#allocation6], 0
    %33 = vsyncpa [#allocation9], 0
    %34 = vsyncpa [#allocation12], 0
    %35 = vsyncpa [#allocation15], 0
    %36 = vsyncpa [#allocation18], 0
    %37 = vsyncpa [#allocation21], 0
    %38 = vsyncpa [#allocation24], 0
    %39 = vsyncpa [#allocation4], 0
    %s40 = scalar_lea.sflag [#allocation4], 1
    %41 = vsyncpa %s40, 0
    %42 = vsyncpa [#allocation27], 0
    %s43 = scalar_lea.sflag [#allocation27], 1
    %44 = vsyncpa %s43, 0
    %45 = vsyncpa [#allocation30], 0
    %s46 = scalar_lea.sflag [#allocation30], 1
    %47 = vsyncpa %s46, 0
    loop: start=0, step=1, limit=4
    $region2: #{tpu_custom_call.1} parent=1 // loop_pre_header
      _
    $region3: #{tpu_custom_call.1} parent=1 // loop_header
      %s49 = sphi 0, %s53
      %p50 = scmp.ge.s32.totalorder %s49, 4
      %s59 = sphi 0, %s61
      %s62 = sphi 0, %s59
      %s63 = sphi 0, %s62
      %s79 = sphi 0, %s63
      %s85 = sphi 0, %s87
      %s88 = sphi 0, %s85
      %s89 = sphi 0, %s88
      %s105 = sphi 0, %s89
      %s109 = sphi 0, %s109
      %s111 = sphi 0, %s109
      %s112 = sphi 0, %s111
      %s126 = sphi 0, %s112
      %s130 = sphi 0, %s130
      %s132 = sphi 0, %s130
      %s133 = sphi 0, %s132
      %s147 = sphi 0, %s133
      %s151 = sphi 0, %s151
      %s153 = sphi 0, %s151
      %s154 = sphi 0, %s153
      %s168 = sphi 0, %s154
      %s172 = sphi 0, %s172
      %s174 = sphi 0, %s172
      %s175 = sphi 0, %s174
      %s189 = sphi 0, %s175
      %s193 = sphi 0, %s193
      %s195 = sphi 0, %s193
      %s196 = sphi 0, %s195
      %s210 = sphi 0, %s196
      %s214 = sphi 0, %s214
      %s216 = sphi 0, %s214
      %s217 = sphi 0, %s216
      %s231 = sphi 0, %s217
      %s235 = sphi 0, %s235
      %s237 = sphi 0, %s235
      %s238 = sphi 0, %s237
      %s252 = sphi 0, %s238
      %s256 = sphi 0, %s256
      %s258 = sphi 0, %s256
      %s259 = sphi 0, %s258
      %s273 = sphi 0, %s259
      %s277 = sphi 0, %s277
      %s279 = sphi 0, %s277
      %s280 = sphi 0, %s279
      %s294 = sphi 0, %s280
      %s298 = sphi 0, %s298
      %s300 = sphi 0, %s298
      %s301 = sphi 0, %s300
      %s315 = sphi 0, %s301
      %s319 = sphi 0, %s319
      %s321 = sphi 0, %s319
      %s322 = sphi 0, %s321
      %s336 = sphi 0, %s322
      %s340 = sphi 0, %s340
      %s342 = sphi 0, %s340
      %s343 = sphi 0, %s342
      %s357 = sphi 0, %s343
      %s361 = sphi 0, %s361
      %s363 = sphi 0, %s361
      %s364 = sphi 0, %s363
      %s378 = sphi 0, %s364
      %s382 = sphi 0, %s382
      %s384 = sphi 0, %s382
      %s385 = sphi 0, %s384
      %s399 = sphi 0, %s385
      %s403 = sphi 0, %s403
      %s405 = sphi 0, %s403
      %s406 = sphi 0, %s405
      %s420 = sphi 0, %s406
      %s424 = sphi 0, %s424
      %s426 = sphi 0, %s424
      %s427 = sphi 0, %s426
      %s441 = sphi 0, %s427
      %s445 = sphi 0, %s445
      %s447 = sphi 0, %s445
      %s448 = sphi 0, %s447
      %s462 = sphi 0, %s448
      %s466 = sphi 0, %s466
      %s468 = sphi 0, %s466
      %s469 = sphi 0, %s468
      %s483 = sphi 0, %s469
      %s489 = sphi 0, %s491
      %s492 = sphi 0, %s489
      %s493 = sphi 0, %s492
      %s509 = sphi 0, %s493
      %s515 = sphi 0, %s517
      %s518 = sphi 0, %s515
      %s519 = sphi 0, %s518
      %s535 = sphi 0, %s519
      %s541 = sphi 0, %s543
      %s544 = sphi 0, %s541
      %s545 = sphi 0, %s544
      %s561 = sphi 0, %s545
      %s567 = sphi 0, %s569
      %s570 = sphi 0, %s567
      %s571 = sphi 0, %s570
      %s587 = sphi 0, %s571
    $region4: #{tpu_custom_call.1} parent=1 // loop_header_branch
      %52 = sbr.rel (%p50) target = $region8
    $region5: #{tpu_custom_call.1} parent=1 // loop_body
      %s54 = ssub.s32 %s49, 1
      %s55 = ssub.s32 %s49, 2
      %s56 = sadd.s32 %s49, 1
      %s57 = ssub.s32 %s49, %s56
      %p58 = scmp.eq.s32.totalorder %s57, 0
      %s60 = sadd.s32 %s59, 1
      %s61 = scalar_select %p58, %s59, %s60
      %p64 = pneg %p58
      %p65 = scmp.eq.s32.totalorder %s49, 1
      %p66 = por %p64, %p65
      %p67 = scmp.ne.s32.totalorder %s59, %s62
      %p68 = scmp.eq.s32.totalorder %s49, 0
      %p69 = por %p67, %p68
      %p70 = scmp.ne.s32.totalorder %s59, %s62
      %p71 = scmp.eq.s32.totalorder %s54, 1
      %p72 = por %p70, %p71
      %p73 = scmp.ne.s32.totalorder %s62, %s63
      %p74 = scmp.eq.s32.totalorder %s54, 0
      %p75 = por %p73, %p74
      %p76 = scmp.ne.s32.totalorder %s62, %s63
      %p77 = scmp.eq.s32.totalorder %s55, 1
      %p78 = por %p76, %p77
      %p80 = scmp.ne.s32.totalorder %s63, %s79
      %p81 = scmp.eq.s32.totalorder %s55, 0
      %p82 = por %p80, %p81
      %s83 = ssub.s32 %s49, %s56
      %p84 = scmp.eq.s32.totalorder %s83, 0
      %s86 = sadd.s32 %s85, 1
      %s87 = scalar_select %p84, %s85, %s86
      %p90 = pneg %p84
      %p91 = scmp.eq.s32.totalorder %s49, 1
      %p92 = por %p90, %p91
      %p93 = scmp.ne.s32.totalorder %s85, %s88
      %p94 = scmp.eq.s32.totalorder %s49, 0
      %p95 = por %p93, %p94
      %p96 = scmp.ne.s32.totalorder %s85, %s88
      %p97 = scmp.eq.s32.totalorder %s54, 1
      %p98 = por %p96, %p97
      %p99 = scmp.ne.s32.totalorder %s88, %s89
      %p100 = scmp.eq.s32.totalorder %s54, 0
      %p101 = por %p99, %p100
      %p102 = scmp.ne.s32.totalorder %s88, %s89
      %p103 = scmp.eq.s32.totalorder %s55, 1
      %p104 = por %p102, %p103
      %p106 = scmp.ne.s32.totalorder %s89, %s105
      %p107 = scmp.eq.s32.totalorder %s55, 0
      %p108 = por %p106, %p107
      %s110 = sadd.s32 %s109, 1
      %p113 = scmp.eq.s32.totalorder %s49, 1
      %p114 = scmp.ne.s32.totalorder %s109, %s111
      %p115 = scmp.eq.s32.totalorder %s49, 0
      %p116 = por %p114, %p115
      %p117 = scmp.ne.s32.totalorder %s109, %s111
      %p118 = scmp.eq.s32.totalorder %s54, 1
      %p119 = por %p117, %p118
      %p120 = scmp.ne.s32.totalorder %s111, %s112
      %p121 = scmp.eq.s32.totalorder %s54, 0
      %p122 = por %p120, %p121
      %p123 = scmp.ne.s32.totalorder %s111, %s112
      %p124 = scmp.eq.s32.totalorder %s55, 1
      %p125 = por %p123, %p124
      %p127 = scmp.ne.s32.totalorder %s112, %s126
      %p128 = scmp.eq.s32.totalorder %s55, 0
      %p129 = por %p127, %p128
      %s131 = sadd.s32 %s130, 1
      %p134 = scmp.eq.s32.totalorder %s49, 1
      %p135 = scmp.ne.s32.totalorder %s130, %s132
      %p136 = scmp.eq.s32.totalorder %s49, 0
      %p137 = por %p135, %p136
      %p138 = scmp.ne.s32.totalorder %s130, %s132
      %p139 = scmp.eq.s32.totalorder %s54, 1
      %p140 = por %p138, %p139
      %p141 = scmp.ne.s32.totalorder %s132, %s133
      %p142 = scmp.eq.s32.totalorder %s54, 0
      %p143 = por %p141, %p142
      %p144 = scmp.ne.s32.totalorder %s132, %s133
      %p145 = scmp.eq.s32.totalorder %s55, 1
      %p146 = por %p144, %p145
      %p148 = scmp.ne.s32.totalorder %s133, %s147
      %p149 = scmp.eq.s32.totalorder %s55, 0
      %p150 = por %p148, %p149
      %s152 = sadd.s32 %s151, 1
      %p155 = scmp.eq.s32.totalorder %s49, 1
      %p156 = scmp.ne.s32.totalorder %s151, %s153
      %p157 = scmp.eq.s32.totalorder %s49, 0
      %p158 = por %p156, %p157
      %p159 = scmp.ne.s32.totalorder %s151, %s153
      %p160 = scmp.eq.s32.totalorder %s54, 1
      %p161 = por %p159, %p160
      %p162 = scmp.ne.s32.totalorder %s153, %s154
      %p163 = scmp.eq.s32.totalorder %s54, 0
      %p164 = por %p162, %p163
      %p165 = scmp.ne.s32.totalorder %s153, %s154
      %p166 = scmp.eq.s32.totalorder %s55, 1
      %p167 = por %p165, %p166
      %p169 = scmp.ne.s32.totalorder %s154, %s168
      %p170 = scmp.eq.s32.totalorder %s55, 0
      %p171 = por %p169, %p170
      %s173 = sadd.s32 %s172, 1
      %p176 = scmp.eq.s32.totalorder %s49, 1
      %p177 = scmp.ne.s32.totalorder %s172, %s174
      %p178 = scmp.eq.s32.totalorder %s49, 0
      %p179 = por %p177, %p178
      %p180 = scmp.ne.s32.totalorder %s172, %s174
      %p181 = scmp.eq.s32.totalorder %s54, 1
      %p182 = por %p180, %p181
      %p183 = scmp.ne.s32.totalorder %s174, %s175
      %p184 = scmp.eq.s32.totalorder %s54, 0
      %p185 = por %p183, %p184
      %p186 = scmp.ne.s32.totalorder %s174, %s175
      %p187 = scmp.eq.s32.totalorder %s55, 1
      %p188 = por %p186, %p187
      %p190 = scmp.ne.s32.totalorder %s175, %s189
      %p191 = scmp.eq.s32.totalorder %s55, 0
      %p192 = por %p190, %p191
      %s194 = sadd.s32 %s193, 1
      %p197 = scmp.eq.s32.totalorder %s49, 1
      %p198 = scmp.ne.s32.totalorder %s193, %s195
      %p199 = scmp.eq.s32.totalorder %s49, 0
      %p200 = por %p198, %p199
      %p201 = scmp.ne.s32.totalorder %s193, %s195
      %p202 = scmp.eq.s32.totalorder %s54, 1
      %p203 = por %p201, %p202
      %p204 = scmp.ne.s32.totalorder %s195, %s196
      %p205 = scmp.eq.s32.totalorder %s54, 0
      %p206 = por %p204, %p205
      %p207 = scmp.ne.s32.totalorder %s195, %s196
      %p208 = scmp.eq.s32.totalorder %s55, 1
      %p209 = por %p207, %p208
      %p211 = scmp.ne.s32.totalorder %s196, %s210
      %p212 = scmp.eq.s32.totalorder %s55, 0
      %p213 = por %p211, %p212
      %s215 = sadd.s32 %s214, 1
      %p218 = scmp.eq.s32.totalorder %s49, 1
      %p219 = scmp.ne.s32.totalorder %s214, %s216
      %p220 = scmp.eq.s32.totalorder %s49, 0
      %p221 = por %p219, %p220
      %p222 = scmp.ne.s32.totalorder %s214, %s216
      %p223 = scmp.eq.s32.totalorder %s54, 1
      %p224 = por %p222, %p223
      %p225 = scmp.ne.s32.totalorder %s216, %s217
      %p226 = scmp.eq.s32.totalorder %s54, 0
      %p227 = por %p225, %p226
      %p228 = scmp.ne.s32.totalorder %s216, %s217
      %p229 = scmp.eq.s32.totalorder %s55, 1
      %p230 = por %p228, %p229
      %p232 = scmp.ne.s32.totalorder %s217, %s231
      %p233 = scmp.eq.s32.totalorder %s55, 0
      %p234 = por %p232, %p233
      %s236 = sadd.s32 %s235, 1
      %p239 = scmp.eq.s32.totalorder %s49, 1
      %p240 = scmp.ne.s32.totalorder %s235, %s237
      %p241 = scmp.eq.s32.totalorder %s49, 0
      %p242 = por %p240, %p241
      %p243 = scmp.ne.s32.totalorder %s235, %s237
      %p244 = scmp.eq.s32.totalorder %s54, 1
      %p245 = por %p243, %p244
      %p246 = scmp.ne.s32.totalorder %s237, %s238
      %p247 = scmp.eq.s32.totalorder %s54, 0
      %p248 = por %p246, %p247
      %p249 = scmp.ne.s32.totalorder %s237, %s238
      %p250 = scmp.eq.s32.totalorder %s55, 1
      %p251 = por %p249, %p250
      %p253 = scmp.ne.s32.totalorder %s238, %s252
      %p254 = scmp.eq.s32.totalorder %s55, 0
      %p255 = por %p253, %p254
      %s257 = sadd.s32 %s256, 1
      %p260 = scmp.eq.s32.totalorder %s49, 1
      %p261 = scmp.ne.s32.totalorder %s256, %s258
      %p262 = scmp.eq.s32.totalorder %s49, 0
      %p263 = por %p261, %p262
      %p264 = scmp.ne.s32.totalorder %s256, %s258
      %p265 = scmp.eq.s32.totalorder %s54, 1
      %p266 = por %p264, %p265
      %p267 = scmp.ne.s32.totalorder %s258, %s259
      %p268 = scmp.eq.s32.totalorder %s54, 0
      %p269 = por %p267, %p268
      %p270 = scmp.ne.s32.totalorder %s258, %s259
      %p271 = scmp.eq.s32.totalorder %s55, 1
      %p272 = por %p270, %p271
      %p274 = scmp.ne.s32.totalorder %s259, %s273
      %p275 = scmp.eq.s32.totalorder %s55, 0
      %p276 = por %p274, %p275
      %s278 = sadd.s32 %s277, 1
      %p281 = scmp.eq.s32.totalorder %s49, 1
      %p282 = scmp.ne.s32.totalorder %s277, %s279
      %p283 = scmp.eq.s32.totalorder %s49, 0
      %p284 = por %p282, %p283
      %p285 = scmp.ne.s32.totalorder %s277, %s279
      %p286 = scmp.eq.s32.totalorder %s54, 1
      %p287 = por %p285, %p286
      %p288 = scmp.ne.s32.totalorder %s279, %s280
      %p289 = scmp.eq.s32.totalorder %s54, 0
      %p290 = por %p288, %p289
      %p291 = scmp.ne.s32.totalorder %s279, %s280
      %p292 = scmp.eq.s32.totalorder %s55, 1
      %p293 = por %p291, %p292
      %p295 = scmp.ne.s32.totalorder %s280, %s294
      %p296 = scmp.eq.s32.totalorder %s55, 0
      %p297 = por %p295, %p296
      %s299 = sadd.s32 %s298, 1
      %p302 = scmp.eq.s32.totalorder %s49, 1
      %p303 = scmp.ne.s32.totalorder %s298, %s300
      %p304 = scmp.eq.s32.totalorder %s49, 0
      %p305 = por %p303, %p304
      %p306 = scmp.ne.s32.totalorder %s298, %s300
      %p307 = scmp.eq.s32.totalorder %s54, 1
      %p308 = por %p306, %p307
      %p309 = scmp.ne.s32.totalorder %s300, %s301
      %p310 = scmp.eq.s32.totalorder %s54, 0
      %p311 = por %p309, %p310
      %p312 = scmp.ne.s32.totalorder %s300, %s301
      %p313 = scmp.eq.s32.totalorder %s55, 1
      %p314 = por %p312, %p313
      %p316 = scmp.ne.s32.totalorder %s301, %s315
      %p317 = scmp.eq.s32.totalorder %s55, 0
      %p318 = por %p316, %p317
      %s320 = sadd.s32 %s319, 1
      %p323 = scmp.eq.s32.totalorder %s49, 1
      %p324 = scmp.ne.s32.totalorder %s319, %s321
      %p325 = scmp.eq.s32.totalorder %s49, 0
      %p326 = por %p324, %p325
      %p327 = scmp.ne.s32.totalorder %s319, %s321
      %p328 = scmp.eq.s32.totalorder %s54, 1
      %p329 = por %p327, %p328
      %p330 = scmp.ne.s32.totalorder %s321, %s322
      %p331 = scmp.eq.s32.totalorder %s54, 0
      %p332 = por %p330, %p331
      %p333 = scmp.ne.s32.totalorder %s321, %s322
      %p334 = scmp.eq.s32.totalorder %s55, 1
      %p335 = por %p333, %p334
      %p337 = scmp.ne.s32.totalorder %s322, %s336
      %p338 = scmp.eq.s32.totalorder %s55, 0
      %p339 = por %p337, %p338
      %s341 = sadd.s32 %s340, 1
      %p344 = scmp.eq.s32.totalorder %s49, 1
      %p345 = scmp.ne.s32.totalorder %s340, %s342
      %p346 = scmp.eq.s32.totalorder %s49, 0
      %p347 = por %p345, %p346
      %p348 = scmp.ne.s32.totalorder %s340, %s342
      %p349 = scmp.eq.s32.totalorder %s54, 1
      %p350 = por %p348, %p349
      %p351 = scmp.ne.s32.totalorder %s342, %s343
      %p352 = scmp.eq.s32.totalorder %s54, 0
      %p353 = por %p351, %p352
      %p354 = scmp.ne.s32.totalorder %s342, %s343
      %p355 = scmp.eq.s32.totalorder %s55, 1
      %p356 = por %p354, %p355
      %p358 = scmp.ne.s32.totalorder %s343, %s357
      %p359 = scmp.eq.s32.totalorder %s55, 0
      %p360 = por %p358, %p359
      %s362 = sadd.s32 %s361, 1
      %p365 = scmp.eq.s32.totalorder %s49, 1
      %p366 = scmp.ne.s32.totalorder %s361, %s363
      %p367 = scmp.eq.s32.totalorder %s49, 0
      %p368 = por %p366, %p367
      %p369 = scmp.ne.s32.totalorder %s361, %s363
      %p370 = scmp.eq.s32.totalorder %s54, 1
      %p371 = por %p369, %p370
      %p372 = scmp.ne.s32.totalorder %s363, %s364
      %p373 = scmp.eq.s32.totalorder %s54, 0
      %p374 = por %p372, %p373
      %p375 = scmp.ne.s32.totalorder %s363, %s364
      %p376 = scmp.eq.s32.totalorder %s55, 1
      %p377 = por %p375, %p376
      %p379 = scmp.ne.s32.totalorder %s364, %s378
      %p380 = scmp.eq.s32.totalorder %s55, 0
      %p381 = por %p379, %p380
      %s383 = sadd.s32 %s382, 1
      %p386 = scmp.eq.s32.totalorder %s49, 1
      %p387 = scmp.ne.s32.totalorder %s382, %s384
      %p388 = scmp.eq.s32.totalorder %s49, 0
      %p389 = por %p387, %p388
      %p390 = scmp.ne.s32.totalorder %s382, %s384
      %p391 = scmp.eq.s32.totalorder %s54, 1
      %p392 = por %p390, %p391
      %p393 = scmp.ne.s32.totalorder %s384, %s385
      %p394 = scmp.eq.s32.totalorder %s54, 0
      %p395 = por %p393, %p394
      %p396 = scmp.ne.s32.totalorder %s384, %s385
      %p397 = scmp.eq.s32.totalorder %s55, 1
      %p398 = por %p396, %p397
      %p400 = scmp.ne.s32.totalorder %s385, %s399
      %p401 = scmp.eq.s32.totalorder %s55, 0
      %p402 = por %p400, %p401
      %s404 = sadd.s32 %s403, 1
      %p407 = scmp.eq.s32.totalorder %s49, 1
      %p408 = scmp.ne.s32.totalorder %s403, %s405
      %p409 = scmp.eq.s32.totalorder %s49, 0
      %p410 = por %p408, %p409
      %p411 = scmp.ne.s32.totalorder %s403, %s405
      %p412 = scmp.eq.s32.totalorder %s54, 1
      %p413 = por %p411, %p412
      %p414 = scmp.ne.s32.totalorder %s405, %s406
      %p415 = scmp.eq.s32.totalorder %s54, 0
      %p416 = por %p414, %p415
      %p417 = scmp.ne.s32.totalorder %s405, %s406
      %p418 = scmp.eq.s32.totalorder %s55, 1
      %p419 = por %p417, %p418
      %p421 = scmp.ne.s32.totalorder %s406, %s420
      %p422 = scmp.eq.s32.totalorder %s55, 0
      %p423 = por %p421, %p422
      %s425 = sadd.s32 %s424, 1
      %p428 = scmp.eq.s32.totalorder %s49, 1
      %p429 = scmp.ne.s32.totalorder %s424, %s426
      %p430 = scmp.eq.s32.totalorder %s49, 0
      %p431 = por %p429, %p430
      %p432 = scmp.ne.s32.totalorder %s424, %s426
      %p433 = scmp.eq.s32.totalorder %s54, 1
      %p434 = por %p432, %p433
      %p435 = scmp.ne.s32.totalorder %s426, %s427
      %p436 = scmp.eq.s32.totalorder %s54, 0
      %p437 = por %p435, %p436
      %p438 = scmp.ne.s32.totalorder %s426, %s427
      %p439 = scmp.eq.s32.totalorder %s55, 1
      %p440 = por %p438, %p439
      %p442 = scmp.ne.s32.totalorder %s427, %s441
      %p443 = scmp.eq.s32.totalorder %s55, 0
      %p444 = por %p442, %p443
      %s446 = sadd.s32 %s445, 1
      %p449 = scmp.eq.s32.totalorder %s49, 1
      %p450 = scmp.ne.s32.totalorder %s445, %s447
      %p451 = scmp.eq.s32.totalorder %s49, 0
      %p452 = por %p450, %p451
      %p453 = scmp.ne.s32.totalorder %s445, %s447
      %p454 = scmp.eq.s32.totalorder %s54, 1
      %p455 = por %p453, %p454
      %p456 = scmp.ne.s32.totalorder %s447, %s448
      %p457 = scmp.eq.s32.totalorder %s54, 0
      %p458 = por %p456, %p457
      %p459 = scmp.ne.s32.totalorder %s447, %s448
      %p460 = scmp.eq.s32.totalorder %s55, 1
      %p461 = por %p459, %p460
      %p463 = scmp.ne.s32.totalorder %s448, %s462
      %p464 = scmp.eq.s32.totalorder %s55, 0
      %p465 = por %p463, %p464
      %s467 = sadd.s32 %s466, 1
      %p470 = scmp.eq.s32.totalorder %s49, 1
      %p471 = scmp.ne.s32.totalorder %s466, %s468
      %p472 = scmp.eq.s32.totalorder %s49, 0
      %p473 = por %p471, %p472
      %p474 = scmp.ne.s32.totalorder %s466, %s468
      %p475 = scmp.eq.s32.totalorder %s54, 1
      %p476 = por %p474, %p475
      %p477 = scmp.ne.s32.totalorder %s468, %s469
      %p478 = scmp.eq.s32.totalorder %s54, 0
      %p479 = por %p477, %p478
      %p480 = scmp.ne.s32.totalorder %s468, %s469
      %p481 = scmp.eq.s32.totalorder %s55, 1
      %p482 = por %p480, %p481
      %p484 = scmp.ne.s32.totalorder %s469, %s483
      %p485 = scmp.eq.s32.totalorder %s55, 0
      %p486 = por %p484, %p485
      %s487 = ssub.s32 %s49, %s56
      %p488 = scmp.eq.s32.totalorder %s487, 0
      %s490 = sadd.s32 %s489, 1
      %s491 = scalar_select %p488, %s489, %s490
      %p494 = pneg %p488
      %p495 = scmp.eq.s32.totalorder %s49, 1
      %p496 = por %p494, %p495
      %p497 = scmp.ne.s32.totalorder %s489, %s492
      %p498 = scmp.eq.s32.totalorder %s49, 0
      %p499 = por %p497, %p498
      %p500 = scmp.ne.s32.totalorder %s489, %s492
      %p501 = scmp.eq.s32.totalorder %s54, 1
      %p502 = por %p500, %p501
      %p503 = scmp.ne.s32.totalorder %s492, %s493
      %p504 = scmp.eq.s32.totalorder %s54, 0
      %p505 = por %p503, %p504
      %p506 = scmp.ne.s32.totalorder %s492, %s493
      %p507 = scmp.eq.s32.totalorder %s55, 1
      %p508 = por %p506, %p507
      %p510 = scmp.ne.s32.totalorder %s493, %s509
      %p511 = scmp.eq.s32.totalorder %s55, 0
      %p512 = por %p510, %p511
      %s513 = ssub.s32 %s49, %s56
      %p514 = scmp.eq.s32.totalorder %s513, 0
      %s516 = sadd.s32 %s515, 1
      %s517 = scalar_select %p514, %s515, %s516
      %p520 = pneg %p514
      %p521 = scmp.eq.s32.totalorder %s49, 1
      %p522 = por %p520, %p521
      %p523 = scmp.ne.s32.totalorder %s515, %s518
      %p524 = scmp.eq.s32.totalorder %s49, 0
      %p525 = por %p523, %p524
      %p526 = scmp.ne.s32.totalorder %s515, %s518
      %p527 = scmp.eq.s32.totalorder %s54, 1
      %p528 = por %p526, %p527
      %p529 = scmp.ne.s32.totalorder %s518, %s519
      %p530 = scmp.eq.s32.totalorder %s54, 0
      %p531 = por %p529, %p530
      %p532 = scmp.ne.s32.totalorder %s518, %s519
      %p533 = scmp.eq.s32.totalorder %s55, 1
      %p534 = por %p532, %p533
      %p536 = scmp.ne.s32.totalorder %s519, %s535
      %p537 = scmp.eq.s32.totalorder %s55, 0
      %p538 = por %p536, %p537
      %s539 = ssub.s32 %s49, %s56
      %p540 = scmp.eq.s32.totalorder %s539, 0
      %s542 = sadd.s32 %s541, 1
      %s543 = scalar_select %p540, %s541, %s542
      %p546 = pneg %p540
      %p547 = scmp.eq.s32.totalorder %s49, 1
      %p548 = por %p546, %p547
      %p549 = scmp.ne.s32.totalorder %s541, %s544
      %p550 = scmp.eq.s32.totalorder %s49, 0
      %p551 = por %p549, %p550
      %p552 = scmp.ne.s32.totalorder %s541, %s544
      %p553 = scmp.eq.s32.totalorder %s54, 1
      %p554 = por %p552, %p553
      %p555 = scmp.ne.s32.totalorder %s544, %s545
      %p556 = scmp.eq.s32.totalorder %s54, 0
      %p557 = por %p555, %p556
      %p558 = scmp.ne.s32.totalorder %s544, %s545
      %p559 = scmp.eq.s32.totalorder %s55, 1
      %p560 = por %p558, %p559
      %p562 = scmp.ne.s32.totalorder %s545, %s561
      %p563 = scmp.eq.s32.totalorder %s55, 0
      %p564 = por %p562, %p563
      %s565 = ssub.s32 %s49, %s56
      %p566 = scmp.eq.s32.totalorder %s565, 0
      %s568 = sadd.s32 %s567, 1
      %s569 = scalar_select %p566, %s567, %s568
      %p572 = pneg %p566
      %p573 = scmp.eq.s32.totalorder %s49, 1
      %p574 = por %p572, %p573
      %p575 = scmp.ne.s32.totalorder %s567, %s570
      %p576 = scmp.eq.s32.totalorder %s49, 0
      %p577 = por %p575, %p576
      %p578 = scmp.ne.s32.totalorder %s567, %s570
      %p579 = scmp.eq.s32.totalorder %s54, 1
      %p580 = por %p578, %p579
      %p581 = scmp.ne.s32.totalorder %s570, %s571
      %p582 = scmp.eq.s32.totalorder %s54, 0
      %p583 = por %p581, %p582
      %p584 = scmp.ne.s32.totalorder %s570, %s571
      %p585 = scmp.eq.s32.totalorder %s55, 1
      %p586 = por %p584, %p585
      %p588 = scmp.ne.s32.totalorder %s571, %s587
      %p589 = scmp.eq.s32.totalorder %s55, 0
      %p590 = por %p588, %p589
      %p591 = scmp.le.s32.totalorder 1, %s49
      %p592 = scmp.lt.s32.totalorder %s49, 3
      %p593 = pnand %p591, %p592
      %p594 = pneg %p593
      // Predicated region
      $region9: #{tpu_custom_call.1} parent=5 // pred_check
        _
      $region10: #{tpu_custom_call.1} parent=5 // pred_check_branch
        %596 = sbr.rel (%p593) target = $region12
      $region11: #{tpu_custom_call.1} parent=5 // pred_region
        %s597 = ssub.s32 %s49, 1
        // Predicated region
        $region13: #{tpu_custom_call.1} parent=11 // pred_check
          %p598 = pneg %p122
        $region14: #{tpu_custom_call.1} parent=11 // pred_check_branch
          %600 = sbr.rel (%p598) target = $region16
        $region15: #{tpu_custom_call.1} parent=11 // pred_region
          %602 = vsyncadd [#allocation6], 0
          %s604 = sshll.u32 %s2, 4
          %s605 = int_to_ptr.hbm [resolvable:$true] %s604
          %s606 = sshll.u32 [#allocation5], 4
          %s607 = int_to_ptr.vmem [resolvable:$true] %s606
          %609 = dma.hbm_to_vmem [thread:$0]  %s605, 16, %s607, [#allocation6]
        $region16: #{tpu_custom_call.1} parent=11 // pred_fallthru
          _
        // Predicated region
        $region17: #{tpu_custom_call.1} parent=11 // pred_check
          %p610 = pneg %p143
        $region18: #{tpu_custom_call.1} parent=11 // pred_check_branch
          %612 = sbr.rel (%p610) target = $region20
        $region19: #{tpu_custom_call.1} parent=11 // pred_region
          %614 = vsyncadd [#allocation6], 0
          %s616 = sshll.u32 %s3, 4
          %s617 = int_to_ptr.hbm [resolvable:$true] %s616
          %s618 = sshll.u32 [#allocation7], 4
          %s619 = int_to_ptr.vmem [resolvable:$true] %s618
          %621 = dma.hbm_to_vmem [thread:$0]  %s617, 16, %s619, [#allocation6]
        $region20: #{tpu_custom_call.1} parent=11 // pred_fallthru
          _
        // Predicated region
        $region21: #{tpu_custom_call.1} parent=11 // pred_check
          %p622 = pneg %p164
        $region22: #{tpu_custom_call.1} parent=11 // pred_check_branch
          %624 = sbr.rel (%p622) target = $region24
        $region23: #{tpu_custom_call.1} parent=11 // pred_region
          _
        $region24: #{tpu_custom_call.1} parent=11 // pred_fallthru
          _
        // Predicated region
        $region25: #{tpu_custom_call.1} parent=11 // pred_check
          %p625 = pneg %p185
        $region26: #{tpu_custom_call.1} parent=11 // pred_check_branch
          %627 = sbr.rel (%p625) target = $region28
        $region27: #{tpu_custom_call.1} parent=11 // pred_region
          %629 = vsyncadd [#allocation9], 0
          %s631 = sshll.u32 %s5, 4
          %s632 = int_to_ptr.hbm [resolvable:$true] %s631
          %s633 = sshll.u32 [#allocation8], 4
          %s634 = int_to_ptr.vmem [resolvable:$true] %s633
          %636 = dma.hbm_to_vmem [thread:$0]  %s632, 16, %s634, [#allocation9]
        $region28: #{tpu_custom_call.1} parent=11 // pred_fallthru
          _
        // Predicated region
        $region29: #{tpu_custom_call.1} parent=11 // pred_check
          %p637 = pneg %p206
        $region30: #{tpu_custom_call.1} parent=11 // pred_check_branch
          %639 = sbr.rel (%p637) target = $region32
        $region31: #{tpu_custom_call.1} parent=11 // pred_region
          _
        $region32: #{tpu_custom_call.1} parent=11 // pred_fallthru
          _
        // Predicated region
        $region33: #{tpu_custom_call.1} parent=11 // pred_check
          %p640 = pneg %p227
        $region34: #{tpu_custom_call.1} parent=11 // pred_check_branch
          %642 = sbr.rel (%p640) target = $region36
        $region35: #{tpu_custom_call.1} parent=11 // pred_region
          %644 = vsyncadd [#allocation9], 0
          %s646 = sshll.u32 %s7, 4
          %s647 = int_to_ptr.hbm [resolvable:$true] %s646
          %s648 = sshll.u32 [#allocation10], 4
          %s649 = int_to_ptr.vmem [resolvable:$true] %s648
          %651 = dma.hbm_to_vmem [thread:$0]  %s647, 16, %s649, [#allocation9]
        $region36: #{tpu_custom_call.1} parent=11 // pred_fallthru
          _
        // Predicated region
        $region37: #{tpu_custom_call.1} parent=11 // pred_check
          %p652 = pneg %p248
        $region38: #{tpu_custom_call.1} parent=11 // pred_check_branch
          %654 = sbr.rel (%p652) target = $region40
        $region39: #{tpu_custom_call.1} parent=11 // pred_region
          %656 = vsyncadd [#allocation12], 0
          %s658 = sshll.u32 %s8, 4
          %s659 = int_to_ptr.hbm [resolvable:$true] %s658
          %s660 = sshll.u32 [#allocation11], 4
          %s661 = int_to_ptr.vmem [resolvable:$true] %s660
          %663 = dma.hbm_to_vmem [thread:$0]  %s659, 16, %s661, [#allocation12]
        $region40: #{tpu_custom_call.1} parent=11 // pred_fallthru
          _
        // Predicated region
        $region41: #{tpu_custom_call.1} parent=11 // pred_check
          %p664 = pneg %p269
        $region42: #{tpu_custom_call.1} parent=11 // pred_check_branch
          %666 = sbr.rel (%p664) target = $region44
        $region43: #{tpu_custom_call.1} parent=11 // pred_region
          %668 = vsyncadd [#allocation12], 0
          %s670 = sshll.u32 %s9, 4
          %s671 = int_to_ptr.hbm [resolvable:$true] %s670
          %s672 = sshll.u32 [#allocation13], 4
          %s673 = int_to_ptr.vmem [resolvable:$true] %s672
          %675 = dma.hbm_to_vmem [thread:$0]  %s671, 16, %s673, [#allocation12]
        $region44: #{tpu_custom_call.1} parent=11 // pred_fallthru
          _
        // Predicated region
        $region45: #{tpu_custom_call.1} parent=11 // pred_check
          %p676 = pneg %p290
        $region46: #{tpu_custom_call.1} parent=11 // pred_check_branch
          %678 = sbr.rel (%p676) target = $region48
        $region47: #{tpu_custom_call.1} parent=11 // pred_region
          %680 = vsyncadd [#allocation15], 0
          %s681 = sshll.u32 %s10, 4
          %s682 = int_to_ptr.hbm [resolvable:$true] %s681
          %s683 = sshll.u32 [#allocation14], 4
          %s684 = int_to_ptr.vmem [resolvable:$true] %s683
          %689 = dma.hbm_to_vmem [thread:$0]  %s682, 256, %s684, [#allocation15], 64, 64, 4
        $region48: #{tpu_custom_call.1} parent=11 // pred_fallthru
          _
        // Predicated region
        $region49: #{tpu_custom_call.1} parent=11 // pred_check
          %p690 = pneg %p311
        $region50: #{tpu_custom_call.1} parent=11 // pred_check_branch
          %692 = sbr.rel (%p690) target = $region52
        $region51: #{tpu_custom_call.1} parent=11 // pred_region
          %694 = vsyncadd [#allocation15], 0
          %s696 = sshll.u32 %s11, 4
          %s697 = int_to_ptr.hbm [resolvable:$true] %s696
          %s698 = sshll.u32 [#allocation16], 4
          %s699 = int_to_ptr.vmem [resolvable:$true] %s698
          %701 = dma.hbm_to_vmem [thread:$0]  %s697, 16, %s699, [#allocation15]
        $region52: #{tpu_custom_call.1} parent=11 // pred_fallthru
          _
        // Predicated region
        $region53: #{tpu_custom_call.1} parent=11 // pred_check
          %p702 = pneg %p332
        $region54: #{tpu_custom_call.1} parent=11 // pred_check_branch
          %704 = sbr.rel (%p702) target = $region56
        $region55: #{tpu_custom_call.1} parent=11 // pred_region
          _
        $region56: #{tpu_custom_call.1} parent=11 // pred_fallthru
          _
        // Predicated region
        $region57: #{tpu_custom_call.1} parent=11 // pred_check
          %p705 = pneg %p353
        $region58: #{tpu_custom_call.1} parent=11 // pred_check_branch
          %707 = sbr.rel (%p705) target = $region60
        $region59: #{tpu_custom_call.1} parent=11 // pred_region
          %709 = vsyncadd [#allocation18], 0
          %s711 = sshll.u32 %s13, 4
          %s712 = int_to_ptr.hbm [resolvable:$true] %s711
          %s713 = sshll.u32 [#allocation17], 4
          %s714 = int_to_ptr.vmem [resolvable:$true] %s713
          %716 = dma.hbm_to_vmem [thread:$0]  %s712, 16, %s714, [#allocation18]
        $region60: #{tpu_custom_call.1} parent=11 // pred_fallthru
          _
        // Predicated region
        $region61: #{tpu_custom_call.1} parent=11 // pred_check
          %p717 = pneg %p374
        $region62: #{tpu_custom_call.1} parent=11 // pred_check_branch
          %719 = sbr.rel (%p717) target = $region64
        $region63: #{tpu_custom_call.1} parent=11 // pred_region
          %721 = vsyncadd [#allocation18], 0
          %s723 = sshll.u32 %s14, 4
          %s724 = int_to_ptr.hbm [resolvable:$true] %s723
          %s725 = sshll.u32 [#allocation19], 4
          %s726 = int_to_ptr.vmem [resolvable:$true] %s725
          %728 = dma.hbm_to_vmem [thread:$0]  %s724, 16, %s726, [#allocation18]
        $region64: #{tpu_custom_call.1} parent=11 // pred_fallthru
          _
        // Predicated region
        $region65: #{tpu_custom_call.1} parent=11 // pred_check
          %p729 = pneg %p395
        $region66: #{tpu_custom_call.1} parent=11 // pred_check_branch
          %731 = sbr.rel (%p729) target = $region68
        $region67: #{tpu_custom_call.1} parent=11 // pred_region
          %733 = vsyncadd [#allocation21], 0
          %s735 = sshll.u32 %s15, 4
          %s736 = int_to_ptr.hbm [resolvable:$true] %s735
          %s737 = sshll.u32 [#allocation20], 4
          %s738 = int_to_ptr.vmem [resolvable:$true] %s737
          %740 = dma.hbm_to_vmem [thread:$0]  %s736, 16, %s738, [#allocation21]
        $region68: #{tpu_custom_call.1} parent=11 // pred_fallthru
          _
        // Predicated region
        $region69: #{tpu_custom_call.1} parent=11 // pred_check
          %p741 = pneg %p416
        $region70: #{tpu_custom_call.1} parent=11 // pred_check_branch
          %743 = sbr.rel (%p741) target = $region72
        $region71: #{tpu_custom_call.1} parent=11 // pred_region
          %745 = vsyncadd [#allocation21], 0
          %s746 = sshll.u32 %s16, 4
          %s747 = int_to_ptr.hbm [resolvable:$true] %s746
          %s748 = sshll.u32 [#allocation22], 4
          %s749 = int_to_ptr.vmem [resolvable:$true] %s748
          %754 = dma.hbm_to_vmem [thread:$0]  %s747, 256, %s749, [#allocation21], 64, 64, 4
        $region72: #{tpu_custom_call.1} parent=11 // pred_fallthru
          _
        // Predicated region
        $region73: #{tpu_custom_call.1} parent=11 // pred_check
          %p755 = pneg %p437
        $region74: #{tpu_custom_call.1} parent=11 // pred_check_branch
          %757 = sbr.rel (%p755) target = $region76
        $region75: #{tpu_custom_call.1} parent=11 // pred_region
          %759 = vsyncadd [#allocation24], 0
          %s761 = sshll.u32 %s17, 4
          %s762 = int_to_ptr.hbm [resolvable:$true] %s761
          %s763 = sshll.u32 [#allocation23], 4
          %s764 = int_to_ptr.vmem [resolvable:$true] %s763
          %766 = dma.hbm_to_vmem [thread:$0]  %s762, 16, %s764, [#allocation24]
        $region76: #{tpu_custom_call.1} parent=11 // pred_fallthru
          _
        // Predicated region
        $region77: #{tpu_custom_call.1} parent=11 // pred_check
          %p767 = pneg %p458
        $region78: #{tpu_custom_call.1} parent=11 // pred_check_branch
          %769 = sbr.rel (%p767) target = $region80
        $region79: #{tpu_custom_call.1} parent=11 // pred_region
          _
        $region80: #{tpu_custom_call.1} parent=11 // pred_fallthru
          _
        // Predicated region
        $region81: #{tpu_custom_call.1} parent=11 // pred_check
          %p770 = pneg %p479
        $region82: #{tpu_custom_call.1} parent=11 // pred_check_branch
          %772 = sbr.rel (%p770) target = $region84
        $region83: #{tpu_custom_call.1} parent=11 // pred_region
          _
        $region84: #{tpu_custom_call.1} parent=11 // pred_fallthru
          _
      $region12: #{tpu_custom_call.1} parent=5 // pred_fallthru
        _
      %p773 = scmp.lt.s32.totalorder %s49, 2
      // Predicated region
      $region85: #{tpu_custom_call.1} parent=5 // pred_check
        %p774 = pneg %p773
      $region86: #{tpu_custom_call.1} parent=5 // pred_check_branch
        %776 = sbr.rel (%p774) target = $region88
      $region87: #{tpu_custom_call.1} parent=5 // pred_region
        // Predicated region
        $region89: #{tpu_custom_call.1} parent=87 // pred_check
          %p777 = pneg %p69
        $region90: #{tpu_custom_call.1} parent=87 // pred_check_branch
          %779 = sbr.rel (%p777) target = $region92
        $region91: #{tpu_custom_call.1} parent=87 // pred_region
          %p780 = scmp.lt.s32.totalorder %s49, 1
          %s781 = scalar_select %p780, %s49, 1
          %s782 = smul.addr %s781, 8
          %s783 = scalar_lea.vmem %s0, %s782
        $region92: #{tpu_custom_call.1} parent=87 // pred_fallthru
          _
        // Predicated region
        $region93: #{tpu_custom_call.1} parent=87 // pred_check
          %p784 = pneg %p95
        $region94: #{tpu_custom_call.1} parent=87 // pred_check_branch
          %786 = sbr.rel (%p784) target = $region96
        $region95: #{tpu_custom_call.1} parent=87 // pred_region
          %s787 = sand.u32 %s85, 1
          %s788 = scalar_lea.sflag [#allocation3], %s787
          %s789 = sand.u32 %s85, 1
          %s790 = scalar_lea.vmem [#allocation2], %s789
          %792 = vsyncadd %s788, 0
          %s793 = scalar_lea.hbm %s1, %s49
          %s795 = sshll.u32 %s793, 4
          %s796 = int_to_ptr.hbm [resolvable:$true] %s795
          %s797 = sshll.u32 %s790, 4
          %s798 = int_to_ptr.vmem [resolvable:$true] %s797
          %800 = dma.hbm_to_vmem [thread:$0]  %s796, 16, %s798, %s788
        $region96: #{tpu_custom_call.1} parent=87 // pred_fallthru
          _
      $region88: #{tpu_custom_call.1} parent=5 // pred_fallthru
        _
      %p801 = scmp.le.s32.totalorder 1, %s49
      %p802 = scmp.lt.s32.totalorder %s49, 3
      %p803 = pnand %p801, %p802
      %p804 = pneg %p803
      // Predicated region
      $region97: #{tpu_custom_call.1} parent=5 // pred_check
        _
      $region98: #{tpu_custom_call.1} parent=5 // pred_check_branch
        %806 = sbr.rel (%p803) target = $region100
      $region99: #{tpu_custom_call.1} parent=5 // pred_region
        %s807 = ssub.s32 %s49, 1
        %s808 = sand.u32 %s88, 1
        %s809 = scalar_lea.sflag [#allocation3], %s808
        %s810 = sand.u32 %s88, 1
        %s811 = scalar_lea.vmem [#allocation2], %s810
        // Predicated region
        $region101: #{tpu_custom_call.1} parent=99 // pred_check
          %p812 = pneg %p101
        $region102: #{tpu_custom_call.1} parent=99 // pred_check_branch
          %814 = sbr.rel (%p812) target = $region104
        $region103: #{tpu_custom_call.1} parent=99 // pred_region
          %816 = dma.done %s809, 16
        $region104: #{tpu_custom_call.1} parent=99 // pred_fallthru
          _
        // Predicated region
        $region105: #{tpu_custom_call.1} parent=99 // pred_check
          %p817 = pneg %p122
        $region106: #{tpu_custom_call.1} parent=99 // pred_check_branch
          %819 = sbr.rel (%p817) target = $region108
        $region107: #{tpu_custom_call.1} parent=99 // pred_region
          %821 = dma.done [#allocation6], 16
        $region108: #{tpu_custom_call.1} parent=99 // pred_fallthru
          _
        // Predicated region
        $region109: #{tpu_custom_call.1} parent=99 // pred_check
          %p822 = pneg %p143
        $region110: #{tpu_custom_call.1} parent=99 // pred_check_branch
          %824 = sbr.rel (%p822) target = $region112
        $region111: #{tpu_custom_call.1} parent=99 // pred_region
          %826 = dma.done [#allocation6], 16
        $region112: #{tpu_custom_call.1} parent=99 // pred_fallthru
          _
        // Predicated region
        $region113: #{tpu_custom_call.1} parent=99 // pred_check
          %p827 = pneg %p185
        $region114: #{tpu_custom_call.1} parent=99 // pred_check_branch
          %829 = sbr.rel (%p827) target = $region116
        $region115: #{tpu_custom_call.1} parent=99 // pred_region
          %831 = dma.done [#allocation9], 16
        $region116: #{tpu_custom_call.1} parent=99 // pred_fallthru
          _
        // Predicated region
        $region117: #{tpu_custom_call.1} parent=99 // pred_check
          %p832 = pneg %p227
        $region118: #{tpu_custom_call.1} parent=99 // pred_check_branch
          %834 = sbr.rel (%p832) target = $region120
        $region119: #{tpu_custom_call.1} parent=99 // pred_region
          %836 = dma.done [#allocation9], 16
        $region120: #{tpu_custom_call.1} parent=99 // pred_fallthru
          _
        // Predicated region
        $region121: #{tpu_custom_call.1} parent=99 // pred_check
          %p837 = pneg %p248
        $region122: #{tpu_custom_call.1} parent=99 // pred_check_branch
          %839 = sbr.rel (%p837) target = $region124
        $region123: #{tpu_custom_call.1} parent=99 // pred_region
          %841 = dma.done [#allocation12], 16
        $region124: #{tpu_custom_call.1} parent=99 // pred_fallthru
          _
        // Predicated region
        $region125: #{tpu_custom_call.1} parent=99 // pred_check
          %p842 = pneg %p269
        $region126: #{tpu_custom_call.1} parent=99 // pred_check_branch
          %844 = sbr.rel (%p842) target = $region128
        $region127: #{tpu_custom_call.1} parent=99 // pred_region
          %846 = dma.done [#allocation12], 16
        $region128: #{tpu_custom_call.1} parent=99 // pred_fallthru
          _
        // Predicated region
        $region129: #{tpu_custom_call.1} parent=99 // pred_check
          %p847 = pneg %p290
        $region130: #{tpu_custom_call.1} parent=99 // pred_check_branch
          %849 = sbr.rel (%p847) target = $region132
        $region131: #{tpu_custom_call.1} parent=99 // pred_region
          %851 = dma.done [#allocation15], 256
        $region132: #{tpu_custom_call.1} parent=99 // pred_fallthru
          _
        // Predicated region
        $region133: #{tpu_custom_call.1} parent=99 // pred_check
          %p852 = pneg %p311
        $region134: #{tpu_custom_call.1} parent=99 // pred_check_branch
          %854 = sbr.rel (%p852) target = $region136
        $region135: #{tpu_custom_call.1} parent=99 // pred_region
          %856 = dma.done [#allocation15], 16
        $region136: #{tpu_custom_call.1} parent=99 // pred_fallthru
          _
        // Predicated region
        $region137: #{tpu_custom_call.1} parent=99 // pred_check
          %p857 = pneg %p353
        $region138: #{tpu_custom_call.1} parent=99 // pred_check_branch
          %859 = sbr.rel (%p857) target = $region140
        $region139: #{tpu_custom_call.1} parent=99 // pred_region
          %861 = dma.done [#allocation18], 16
        $region140: #{tpu_custom_call.1} parent=99 // pred_fallthru
          _
        // Predicated region
        $region141: #{tpu_custom_call.1} parent=99 // pred_check
          %p862 = pneg %p374
        $region142: #{tpu_custom_call.1} parent=99 // pred_check_branch
          %864 = sbr.rel (%p862) target = $region144
        $region143: #{tpu_custom_call.1} parent=99 // pred_region
          %866 = dma.done [#allocation18], 16
        $region144: #{tpu_custom_call.1} parent=99 // pred_fallthru
          _
        // Predicated region
        $region145: #{tpu_custom_call.1} parent=99 // pred_check
          %p867 = pneg %p395
        $region146: #{tpu_custom_call.1} parent=99 // pred_check_branch
          %869 = sbr.rel (%p867) target = $region148
        $region147: #{tpu_custom_call.1} parent=99 // pred_region
          %871 = dma.done [#allocation21], 16
        $region148: #{tpu_custom_call.1} parent=99 // pred_fallthru
          _
        // Predicated region
        $region149: #{tpu_custom_call.1} parent=99 // pred_check
          %p872 = pneg %p416
        $region150: #{tpu_custom_call.1} parent=99 // pred_check_branch
          %874 = sbr.rel (%p872) target = $region152
        $region151: #{tpu_custom_call.1} parent=99 // pred_region
          %876 = dma.done [#allocation21], 256
        $region152: #{tpu_custom_call.1} parent=99 // pred_fallthru
          _
        // Predicated region
        $region153: #{tpu_custom_call.1} parent=99 // pred_check
          %p877 = pneg %p437
        $region154: #{tpu_custom_call.1} parent=99 // pred_check_branch
          %879 = sbr.rel (%p877) target = $region156
        $region155: #{tpu_custom_call.1} parent=99 // pred_region
          %881 = dma.done [#allocation24], 16
        $region156: #{tpu_custom_call.1} parent=99 // pred_fallthru
          _
        %p882 = scmp.lt.s32.totalorder %s54, 1
        %s883 = scalar_select %p882, %s54, 1
        %s884 = smul.addr %s883, 8
        %s885 = scalar_lea.vmem %s0, %s884
        %p886 = pneg %p75
        %p887 = pneg %p72
        %s888 = sand.u32 %s88, 1
        %s889 = scalar_lea.sflag [#allocation3], %s888
        %s890 = sand.u32 %s88, 1
        %s891 = scalar_lea.vmem [#allocation2], %s890
        %p892 = pneg %p101
        %p893 = pneg %p98
        %p894 = pneg %p122
        %p895 = pneg %p119
        %p896 = pneg %p143
        %p897 = pneg %p140
        %p898 = pneg %p164
        %p899 = pneg %p161
        %p900 = pneg %p185
        %p901 = pneg %p182
        %p902 = pneg %p206
        %p903 = pneg %p203
        %p904 = pneg %p227
        %p905 = pneg %p224
        %p906 = pneg %p248
        %p907 = pneg %p245
        %p908 = pneg %p269
        %p909 = pneg %p266
        %p910 = pneg %p290
        %p911 = pneg %p287
        %p912 = pneg %p311
        %p913 = pneg %p308
        %p914 = pneg %p332
        %p915 = pneg %p329
        %p916 = pneg %p353
        %p917 = pneg %p350
        %p918 = pneg %p374
        %p919 = pneg %p371
        %p920 = pneg %p395
        %p921 = pneg %p392
        %p922 = pneg %p416
        %p923 = pneg %p413
        %p924 = pneg %p437
        %p925 = pneg %p434
        %p926 = pneg %p458
        %p927 = pneg %p455
        %p928 = pneg %p479
        %p929 = pneg %p476
        %p930 = pneg %p505
        %p931 = pneg %p502
        %s932 = sand.u32 %s492, 1
        %s933 = scalar_lea.sflag [#allocation4], %s932
        %s934 = sand.u32 %s492, 1
        %s935 = smul.addr %s934, 8
        %s936 = scalar_lea.vmem [#allocation25], %s935
        %p937 = pneg %p531
        %p938 = pneg %p528
        %s939 = sand.u32 %s54, 1
        %s940 = scalar_lea.sflag [#allocation27], %s939
        %s941 = sand.u32 %s518, 1
        %s942 = scalar_lea.vmem [#allocation26], %s941
        %p943 = pneg %p557
        %p944 = pneg %p554
        %s945 = sand.u32 %s54, 1
        %s946 = scalar_lea.sflag [#allocation27], %s945
        %s947 = sand.u32 %s544, 1
        %s948 = smul.addr %s947, 16
        %s949 = scalar_lea.vmem [#allocation28], %s948
        %p950 = pneg %p583
        %p951 = pneg %p580
        %s952 = sand.u32 %s570, 1
        %s953 = scalar_lea.sflag [#allocation30], %s952
        %s954 = sand.u32 %s570, 1
        %s955 = smul.addr %s954, 8
        %s956 = scalar_lea.vmem [#allocation29], %s955
        %p957 = scmp.lt.s32.totalorder %s54, 1
        %s958 = scalar_select %p957, %s54, 1
        %s959 = smul.addr %s958, 8
        %s960 = scalar_lea.vmem %s0, %s959
        %v962 = vld [vmem:[%s960] sm:$0xff]
        %vm963 = vcmask 261120
        %v964 = vsel %vm963, %v962, 0.0
        %965 = vadd.xlane.f32.xlu0 %v964
        %v966 = vpop.xlane.xlu0 %965
        %v967 = vrcp.pop 32.0
        %v968 = vmul.f32 32.0, %v967
        %v969 = vsub.f32 1.0, %v968
        %v970 = vmul.f32 %v967, %v969
        %v971 = vadd.f32 %v967, %v970
        %vm972 = vweird.f32 %v967
        %v973 = vsel %vm972, %v967, %v971
        %v974 = vmul.f32 %v966, %v973
        %v975 = vsub.f32 %v962, %v974
        %v976 = vmul.f32 %v975, %v975
        %v977 = vsel %vm963, %v976, 0.0
        %978 = vadd.xlane.f32.xlu0 %v977
        %v979 = vpop.xlane.xlu0 %978
        %v980 = vmul.f32 %v979, %v973
        %v981 = vadd.f32 %v980, 1e-12
        %v982 = vrsqrt.pop %v981
        %v983 = vmul.f32 %v982, %v981
        %v984 = vmul.f32 %v983, %v982
        %v985 = vmul.f32 0.5, %v984
        %v986 = vsub.f32 1.5, %v985
        %v987 = vmul.f32 %v982, %v986
        %vm988 = vweird.f32 %v981
        %vm989 = vweird.f32 %v982
        %vm990 = vmor %vm988, %vm989
        %v991 = vsel %vm990, %v982, %v987
        %v992 = vmul.f32 %v975, %v991
        %v993 = vld [vmem:[#allocation5] sm:$0x1]
        %v995 = vperm.slane %v993, 0
        %v997 = vmul.f32 %v992, %v995
        %v998 = vld [vmem:[#allocation7] sm:$0x1]
        %v1000 = vperm.slane %v998, 0
        %v1002 = vadd.f32 %v997, %v1000
        %v1003 = vpack.c.bf16 %v1002, %v1002
        %v1004 = vld [vmem:[%s4] sm:$0xf]
        %v1005 = vld [vmem:[%s4 + $0x4] sm:$0xf]
        %v1006 = vld [vmem:[%s4 + $0x8] sm:$0xf]
        %v1007 = vld [vmem:[%s4 + $0xc] sm:$0xf]
        %v1008 = vld [vmem:[#allocation8] sm:$0x1]
        %v1010 = vperm.slane %v1008, 0
        %v1016 = vunpack.c.l.b16 %v1004
        %v1017 = vunpack.c.l.b16 %v1005
        %v1018 = vunpack.c.l.b16 %v1006
        %v1019 = vunpack.c.l.b16 %v1007
        %v1020 = vpack.c.b16 %v1017, %v1016
        %v1021 = vpack.c.b16 %v1019, %v1018
        %v1025 = vsel %vm963, %v1003, 0
        %1027 = vmatpush.bf16.msra.mxu0 0
        %1028 = vmatpush.bf16.msra.mxu0 0
        %1029 = vmatpush.bf16.msra.mxu0 0
        %1030 = vmatpush.bf16.msra.mxu0 0
        %1031 = vmatpush.bf16.msra.mxu0 0
        %1032 = vmatpush.bf16.msra.mxu0 0
        %1033 = vmatpush.bf16.msra.mxu0 %v1021
        %1034 = vmatpush.bf16.msra.mxu0 %v1020
        %1035 = vmatmul.bf16.gmra.mxu0 %v1025
        %v1036 = vpop.f32.mrf.mxu0
        %v1037 = vadd.f32 %v1010, %v1036
        %v1038 = vpop.f32.mrf.mxu0
        %1039 = vdwg.mxu0
        %v1040 = vld [vmem:[%s811] sm:$0x1]
        %v1041 = vsub.f32 1.0, %v1040
        %v1042 = vmul.f32 %v1041, -1e+09
        %v1043 = vld [vmem:[%s6] sm:$0xf]
        %v1044 = vld [vmem:[%s6 + $0x4] sm:$0xf]
        %v1045 = vld [vmem:[%s6 + $0x8] sm:$0xf]
        %v1046 = vld [vmem:[%s6 + $0xc] sm:$0xf]
        %v1047 = vpack.c.bf16 %v1037, %v1037
        %1049 = vrot.lane.b32.xlu0 %v1047, 96
        %v1050 = vpop.permute.xlu0 %1049
        %vm1051 = vcmask 130048
        %v1053 = vsel %vm1051, %v1047, 0
        %v1056 = vsel %vm1051, %v1050, 0
        %1058 = vmatpush.bf16.xpose.msra.mxu0 0
        %1059 = vmatpush.bf16.xpose.msra.mxu0 0
        %1060 = vmatpush.bf16.xpose.msra.mxu0 0
        %1061 = vmatpush.bf16.xpose.msra.mxu0 0
        %1062 = vmatpush.bf16.xpose.msra.mxu0 0
        %1063 = vmatpush.bf16.xpose.msra.mxu0 0
        %1064 = vmatpush.bf16.xpose.msra.mxu0 0
        %1065 = vmatpush.bf16.xpose.msra.mxu0 %v1056
        %1066 = vmatmul.bf16.gmra.mxu0 %v1053
        %v1067 = vpop.f32.mrf.mxu0
        %v1068 = vadd.f32 0.0, %v1067
        %v1069 = vpop.f32.mrf.mxu0
        %1070 = vdwg.mxu0
        %v1071 = vmul.f32 %v1068, 0.25
        %v1073 = vperm.slane %v1042, 0
        %v1075 = vadd.f32 %v1071, %v1073
        %vm1076 = vcmask 64512
        %v1077 = vsel %vm1076, %v1075, -inf
        %1078 = vmax.xlane.f32.xlu0 %v1077
        %v1079 = vpop.xlane.xlu0 %1078
        %v1080 = vsub.f32 %v1075, %v1079
        %v1081 = vmul.f32 %v1080, 1.442695
        %v1082 = vpow.pop %v1081
        %v1083 = vsel %vm1076, %v1082, 0.0
        %1084 = vadd.xlane.f32.xlu0 %v1083
        %v1085 = vpop.xlane.xlu0 %1084
        %v1086 = vrcp.pop %v1085
        %v1087 = vmul.f32 %v1085, %v1086
        %v1088 = vsub.f32 1.0, %v1087
        %v1089 = vmul.f32 %v1086, %v1088
        %v1090 = vadd.f32 %v1086, %v1089
        %vm1091 = vweird.f32 %v1085
        %vm1092 = vweird.f32 %v1086
        %vm1093 = vmor %vm1091, %vm1092
        %v1094 = vsel %vm1093, %v1086, %v1090
        %v1095 = vand.u32 2147483647, %v1085
        %vm1096 = vcmp.eq.f32.partialorder %v1095, 8.507059e+37
        %v1097 = vand.u32 %v1085, 2147483648
        %v1098 = vor.u32 1.1754944e-38, %v1097
        %v1099 = vsel %vm1096, %v1098, %v1094
        %v1100 = vmul.f32 %v1082, %v1099
        %1101 = vst.msk [vmem:[%s949] sm:$0xff] %vm1076, %v1100
        %v1102 = vpack.c.bf16 %v1100, %v1100
        %1103 = vrot.lane.b32.xlu0 %v1047, 64
        %v1104 = vpop.permute.xlu0 %1103
        %v1106 = vsel %vm1076, %v1102, 0
        %vm1108 = vcmask 1043456
        %v1110 = vsel %vm1108, %v1104, 0
        %1112 = vmatpush.bf16.msra.mxu0 0
        %1113 = vmatpush.bf16.msra.mxu0 0
        %1114 = vmatpush.bf16.msra.mxu0 0
        %1115 = vmatpush.bf16.msra.mxu0 0
        %1116 = vmatpush.bf16.msra.mxu0 0
        %1117 = vmatpush.bf16.msra.mxu0 0
        %1118 = vmatpush.bf16.msra.mxu0 0
        %1119 = vmatpush.bf16.msra.mxu0 %v1110
        %1120 = vmatmul.bf16.gmra.mxu0 %v1106
        %v1121 = vpop.f32.mrf.mxu0
        %v1122 = vadd.f32 0.0, %v1121
        %v1123 = vpop.f32.mrf.mxu0
        %1124 = vdwg.mxu0
        %v1125 = vpack.c.bf16 %v1122, %v1122
        %1126 = vrot.lane.b32.xlu0 %v1047, 112
        %v1127 = vpop.permute.xlu0 %1126
        %1128 = vrot.lane.b32.xlu0 %v1047, 80
        %v1129 = vpop.permute.xlu0 %1128
        %v1131 = vsel %vm1051, %v1127, 0
        %v1134 = vsel %vm1051, %v1129, 0
        %1136 = vmatpush.bf16.xpose.msra.mxu0 0
        %1137 = vmatpush.bf16.xpose.msra.mxu0 0
        %1138 = vmatpush.bf16.xpose.msra.mxu0 0
        %1139 = vmatpush.bf16.xpose.msra.mxu0 0
        %1140 = vmatpush.bf16.xpose.msra.mxu0 0
        %1141 = vmatpush.bf16.xpose.msra.mxu0 0
        %1142 = vmatpush.bf16.xpose.msra.mxu0 0
        %1143 = vmatpush.bf16.xpose.msra.mxu0 %v1134
        %1144 = vmatmul.bf16.gmra.mxu0 %v1131
        %v1145 = vpop.f32.mrf.mxu0
        %v1146 = vadd.f32 0.0, %v1145
        %v1147 = vpop.f32.mrf.mxu0
        %1148 = vdwg.mxu0
        %v1149 = vmul.f32 %v1146, 0.25
        %v1150 = vadd.f32 %v1149, %v1073
        %v1151 = vsel %vm1076, %v1150, -inf
        %1152 = vmax.xlane.f32.xlu0 %v1151
        %v1153 = vpop.xlane.xlu0 %1152
        %v1154 = vsub.f32 %v1150, %v1153
        %v1155 = vmul.f32 %v1154, 1.442695
        %v1156 = vpow.pop %v1155
        %v1157 = vsel %vm1076, %v1156, 0.0
        %1158 = vadd.xlane.f32.xlu0 %v1157
        %v1159 = vpop.xlane.xlu0 %1158
        %v1160 = vrcp.pop %v1159
        %v1161 = vmul.f32 %v1159, %v1160
        %v1162 = vsub.f32 1.0, %v1161
        %v1163 = vmul.f32 %v1160, %v1162
        %v1164 = vadd.f32 %v1160, %v1163
        %vm1165 = vweird.f32 %v1159
        %vm1166 = vweird.f32 %v1160
        %vm1167 = vmor %vm1165, %vm1166
        %v1168 = vsel %vm1167, %v1160, %v1164
        %v1169 = vand.u32 2147483647, %v1159
        %vm1170 = vcmp.eq.f32.partialorder %v1169, 8.507059e+37
        %v1171 = vand.u32 %v1159, 2147483648
        %v1172 = vor.u32 1.1754944e-38, %v1171
        %v1173 = vsel %vm1170, %v1172, %v1168
        %v1174 = vmul.f32 %v1156, %v1173
        %s1175 = scalar_lea.vmem %s949, 8 [#allocation28]
        %1176 = vst.msk [vmem:[%s1175] sm:$0xff] %vm1076, %v1174
        %v1177 = vpack.c.bf16 %v1174, %v1174
        %1178 = vrot.lane.b32.xlu0 %v1047, 48
        %v1179 = vpop.permute.xlu0 %1178
        %v1181 = vsel %vm1076, %v1177, 0
        %v1184 = vsel %vm1108, %v1179, 0
        %1186 = vmatpush.bf16.msra.mxu0 0
        %1187 = vmatpush.bf16.msra.mxu0 0
        %1188 = vmatpush.bf16.msra.mxu0 0
        %1189 = vmatpush.bf16.msra.mxu0 0
        %1190 = vmatpush.bf16.msra.mxu0 0
        %1191 = vmatpush.bf16.msra.mxu0 0
        %1192 = vmatpush.bf16.msra.mxu0 0
        %1193 = vmatpush.bf16.msra.mxu0 %v1184
        %1194 = vmatmul.bf16.gmra.mxu0 %v1181
        %v1195 = vpop.f32.mrf.mxu0
        %v1196 = vadd.f32 0.0, %v1195
        %v1197 = vpop.f32.mrf.mxu0
        %1198 = vdwg.mxu0
        %v1199 = vpack.c.bf16 %v1196, %v1196
        %v1202 = vunpack.c.l.b16 %v1045
        %v1203 = vunpack.c.l.b16 %v1046
        %v1204 = vpack.c.b16 %v1203, %v1202
        %v1207 = vsel %vm1051, %v1199, 0
        %1209 = vmatpush.bf16.msra.mxu0 0
        %1210 = vmatpush.bf16.msra.mxu0 0
        %1211 = vmatpush.bf16.msra.mxu0 0
        %1212 = vmatpush.bf16.msra.mxu0 0
        %1213 = vmatpush.bf16.msra.mxu0 0
        %1214 = vmatpush.bf16.msra.mxu0 0
        %1215 = vmatpush.bf16.msra.mxu0 0
        %1216 = vmatpush.bf16.msra.mxu0 %v1204
        %1217 = vmatmul.bf16.gmra.mxu0 %v1207
        %v1218 = vpop.f32.mrf.mxu0
        %v1219 = vadd.f32 0.0, %v1218
        %v1220 = vpop.f32.mrf.mxu0
        %1221 = vdwg.mxu0
        %v1224 = vunpack.c.l.b16 %v1043
        %v1225 = vunpack.c.l.b16 %v1044
        %v1226 = vpack.c.b16 %v1225, %v1224
        %v1229 = vsel %vm1051, %v1125, 0
        %1231 = vmatpush.bf16.msra.mxu0 0
        %1232 = vmatpush.bf16.msra.mxu0 0
        %1233 = vmatpush.bf16.msra.mxu0 0
        %1234 = vmatpush.bf16.msra.mxu0 0
        %1235 = vmatpush.bf16.msra.mxu0 0
        %1236 = vmatpush.bf16.msra.mxu0 0
        %1237 = vmatpush.bf16.msra.mxu0 0
        %1238 = vmatpush.bf16.msra.mxu0 %v1226
        %1239 = vmatmul.bf16.gmra.mxu0 %v1229
        %v1240 = vpop.f32.mrf.mxu0
        %v1241 = vadd.f32 %v1219, %v1240
        %v1242 = vpop.f32.mrf.mxu0
        %1243 = vdwg.mxu0
        %v1244 = vld [vmem:[#allocation10] sm:$0x1]
        %v1246 = vperm.slane %v1244, 0
        %v1248 = vadd.f32 %v1241, %v1246
        %v1249 = vadd.f32 %v1248, %v1002
        %v1250 = vsel %vm963, %v1249, 0.0
        %1251 = vadd.xlane.f32.xlu0 %v1250
        %v1252 = vpop.xlane.xlu0 %1251
        %v1253 = vmul.f32 %v1252, %v973
        %v1254 = vsub.f32 %v1249, %v1253
        %v1255 = vmul.f32 %v1254, %v1254
        %v1256 = vsel %vm963, %v1255, 0.0
        %1257 = vadd.xlane.f32.xlu0 %v1256
        %v1258 = vpop.xlane.xlu0 %1257
        %v1259 = vmul.f32 %v1258, %v973
        %v1260 = vadd.f32 %v1259, 1e-12
        %v1261 = vrsqrt.pop %v1260
        %v1262 = vmul.f32 %v1261, %v1260
        %v1263 = vmul.f32 %v1262, %v1261
        %v1264 = vmul.f32 0.5, %v1263
        %v1265 = vsub.f32 1.5, %v1264
        %v1266 = vmul.f32 %v1261, %v1265
        %vm1267 = vweird.f32 %v1260
        %vm1268 = vweird.f32 %v1261
        %vm1269 = vmor %vm1267, %vm1268
        %v1270 = vsel %vm1269, %v1261, %v1266
        %v1271 = vmul.f32 %v1254, %v1270
        %v1272 = vld [vmem:[#allocation11] sm:$0x1]
        %v1274 = vperm.slane %v1272, 0
        %v1276 = vmul.f32 %v1271, %v1274
        %v1277 = vld [vmem:[#allocation13] sm:$0x1]
        %v1279 = vperm.slane %v1277, 0
        %v1281 = vadd.f32 %v1276, %v1279
        %v1282 = vpack.c.bf16 %v1281, %v1281
        %v1283 = vld [vmem:[#allocation14] sm:$0xf]
        %v1284 = vld [vmem:[#allocation14 + $0x4] sm:$0xf]
        %v1285 = vld [vmem:[#allocation14 + $0x8] sm:$0xf]
        %v1286 = vld [vmem:[#allocation14 + $0xc] sm:$0xf]
        %v1287 = vld [vmem:[#allocation16] sm:$0x1]
        %v1289 = vperm.slane %v1287, 0
        %v1295 = vunpack.c.l.b16 %v1283
        %v1296 = vunpack.c.l.b16 %v1284
        %v1297 = vunpack.c.l.b16 %v1285
        %v1298 = vunpack.c.l.b16 %v1286
        %v1299 = vpack.c.b16 %v1296, %v1295
        %v1300 = vpack.c.b16 %v1298, %v1297
        %v1304 = vsel %vm963, %v1282, 0
        %1306 = vmatpush.bf16.msra.mxu0 0
        %1307 = vmatpush.bf16.msra.mxu0 0
        %1308 = vmatpush.bf16.msra.mxu0 0
        %1309 = vmatpush.bf16.msra.mxu0 0
        %1310 = vmatpush.bf16.msra.mxu0 0
        %1311 = vmatpush.bf16.msra.mxu0 0
        %1312 = vmatpush.bf16.msra.mxu0 %v1300
        %1313 = vmatpush.bf16.msra.mxu0 %v1299
        %1314 = vmatmul.bf16.gmra.mxu0 %v1304
        %v1315 = vpop.f32.mrf.mxu0
        %v1316 = vadd.f32 %v1289, %v1315
        %v1317 = vpop.f32.mrf.mxu0
        %1318 = vdwg.mxu0
        %v1319 = vmul.f32 %v1316, 0.5
        %v1320 = vmul.f32 %v1316, 0.044715
        %v1321 = vmul.f32 %v1320, %v1316
        %v1322 = vmul.f32 %v1321, %v1316
        %v1323 = vadd.f32 %v1316, %v1322
        %v1324 = vmul.f32 %v1323, 0.7978846
        %v1325 = vtanh.pop %v1324
        %v1326 = vadd.f32 %v1325, 1.0
        %v1327 = vmul.f32 %v1319, %v1326
        %v1328 = vpack.c.bf16 %v1327, %v1327
        %v1329 = vld [vmem:[%s12] sm:$0xf]
        %v1330 = vld [vmem:[%s12 + $0x4] sm:$0xf]
        %v1331 = vld [vmem:[%s12 + $0x8] sm:$0xf]
        %v1332 = vld [vmem:[%s12 + $0xc] sm:$0xf]
        %v1333 = vld [vmem:[%s12 + $0x10] sm:$0xf]
        %v1334 = vld [vmem:[%s12 + $0x14] sm:$0xf]
        %v1335 = vld [vmem:[%s12 + $0x18] sm:$0xf]
        %v1336 = vld [vmem:[%s12 + $0x1c] sm:$0xf]
        %v1337 = vld [vmem:[#allocation17] sm:$0x1]
        %v1339 = vperm.slane %v1337, 0
        %v1349 = vunpack.c.l.b16 %v1329
        %v1350 = vunpack.c.l.b16 %v1330
        %v1351 = vunpack.c.l.b16 %v1331
        %v1352 = vunpack.c.l.b16 %v1332
        %v1353 = vunpack.c.l.b16 %v1333
        %v1354 = vunpack.c.l.b16 %v1334
        %v1355 = vunpack.c.l.b16 %v1335
        %v1356 = vunpack.c.l.b16 %v1336
        %v1357 = vpack.c.b16 %v1350, %v1349
        %v1358 = vpack.c.b16 %v1352, %v1351
        %v1359 = vpack.c.b16 %v1354, %v1353
        %v1360 = vpack.c.b16 %v1356, %v1355
        %vm1365 = vcmask 523264
        %v1367 = vsel %vm1365, %v1328, 0
        %1369 = vmatpush.bf16.msra.mxu0 0
        %1370 = vmatpush.bf16.msra.mxu0 0
        %1371 = vmatpush.bf16.msra.mxu0 0
        %1372 = vmatpush.bf16.msra.mxu0 0
        %1373 = vmatpush.bf16.msra.mxu0 %v1360
        %1374 = vmatpush.bf16.msra.mxu0 %v1359
        %1375 = vmatpush.bf16.msra.mxu0 %v1358
        %1376 = vmatpush.bf16.msra.mxu0 %v1357
        %1377 = vmatmul.bf16.gmra.mxu0 %v1367
        %v1378 = vpop.f32.mrf.mxu0
        %v1379 = vadd.f32 %v1339, %v1378
        %v1380 = vpop.f32.mrf.mxu0
        %1381 = vdwg.mxu0
        %v1382 = vadd.f32 %v1379, %v1281
        %v1383 = vsel %vm963, %v1382, 0.0
        %1384 = vadd.xlane.f32.xlu0 %v1383
        %v1385 = vpop.xlane.xlu0 %1384
        %v1386 = vmul.f32 %v1385, %v973
        %v1387 = vsub.f32 %v1382, %v1386
        %v1388 = vmul.f32 %v1387, %v1387
        %v1389 = vsel %vm963, %v1388, 0.0
        %1390 = vadd.xlane.f32.xlu0 %v1389
        %v1391 = vpop.xlane.xlu0 %1390
        %v1392 = vmul.f32 %v1391, %v973
        %v1393 = vadd.f32 %v1392, 1e-12
        %v1394 = vrsqrt.pop %v1393
        %v1395 = vmul.f32 %v1394, %v1393
        %v1396 = vmul.f32 %v1395, %v1394
        %v1397 = vmul.f32 0.5, %v1396
        %v1398 = vsub.f32 1.5, %v1397
        %v1399 = vmul.f32 %v1394, %v1398
        %vm1400 = vweird.f32 %v1393
        %vm1401 = vweird.f32 %v1394
        %vm1402 = vmor %vm1400, %vm1401
        %v1403 = vsel %vm1402, %v1394, %v1399
        %v1404 = vmul.f32 %v1387, %v1403
        %v1405 = vld [vmem:[#allocation19] sm:$0x1]
        %v1407 = vperm.slane %v1405, 0
        %v1409 = vmul.f32 %v1404, %v1407
        %v1410 = vld [vmem:[#allocation20] sm:$0x1]
        %v1412 = vperm.slane %v1410, 0
        %v1414 = vadd.f32 %v1409, %v1412
        %1415 = vst.msk [vmem:[%s936] sm:$0xff] %vm963, %v1414
        %v1416 = vpack.c.bf16 %v1414, %v1414
        %v1417 = vld [vmem:[#allocation22] sm:$0xf]
        %v1418 = vld [vmem:[#allocation22 + $0x4] sm:$0xf]
        %v1419 = vld [vmem:[#allocation22 + $0x8] sm:$0xf]
        %v1420 = vld [vmem:[#allocation22 + $0xc] sm:$0xf]
        %v1421 = vld [vmem:[#allocation23] sm:$0x1]
        %v1426 = vunpack.c.l.b16 %v1417
        %v1427 = vunpack.c.l.b16 %v1418
        %v1428 = vunpack.c.l.b16 %v1419
        %v1429 = vunpack.c.l.b16 %v1420
        %v1430 = vpack.c.b16 %v1427, %v1426
        %v1431 = vpack.c.b16 %v1429, %v1428
        %v1435 = vsel %vm963, %v1416, 0
        %1437 = vmatpush.bf16.msra.mxu0 0
        %1438 = vmatpush.bf16.msra.mxu0 0
        %1439 = vmatpush.bf16.msra.mxu0 0
        %1440 = vmatpush.bf16.msra.mxu0 0
        %1441 = vmatpush.bf16.msra.mxu0 0
        %1442 = vmatpush.bf16.msra.mxu0 0
        %1443 = vmatpush.bf16.msra.mxu0 %v1431
        %1444 = vmatpush.bf16.msra.mxu0 %v1430
        %1445 = vmatmul.bf16.gmra.mxu0 %v1435
        %v1446 = vpop.f32.mrf.mxu0
        %v1447 = vadd.f32 %v1421, %v1446
        %v1448 = vpop.f32.mrf.mxu0
        %1449 = vdwg.mxu0
        %v1450 = vtanh.pop %v1447
        %vm1451 = vcmask 253952
        %1452 = vst.msk [vmem:[%s942] sm:$0x1] %vm1451, %v1450
        %v1453 = vld [vmem:[%s18] sm:$0xf]
        %v1454 = vld [vmem:[%s18 + $0x4] sm:$0xf]
        %v1455 = vld [vmem:[%s18 + $0x8] sm:$0xf]
        %v1456 = vld [vmem:[%s18 + $0xc] sm:$0xf]
        %v1457 = vld [vmem:[%s19] sm:$0x1]
        %v1459 = vperm.slane %v1457, 0
        %v1465 = vunpack.c.l.b16 %v1453
        %v1466 = vunpack.c.l.b16 %v1454
        %v1467 = vunpack.c.l.b16 %v1455
        %v1468 = vunpack.c.l.b16 %v1456
        %v1469 = vpack.c.b16 %v1466, %v1465
        %v1470 = vpack.c.b16 %v1468, %v1467
        %1473 = vmatpush.bf16.msra.mxu0 0
        %1474 = vmatpush.bf16.msra.mxu0 0
        %1475 = vmatpush.bf16.msra.mxu0 0
        %1476 = vmatpush.bf16.msra.mxu0 0
        %1477 = vmatpush.bf16.msra.mxu0 0
        %1478 = vmatpush.bf16.msra.mxu0 0
        %1479 = vmatpush.bf16.msra.mxu0 %v1470
        %1480 = vmatpush.bf16.msra.mxu0 %v1469
        %1481 = vmatmul.bf16.gmra.mxu0 %v1435
        %v1482 = vpop.f32.mrf.mxu0
        %v1483 = vadd.f32 %v1459, %v1482
        %v1484 = vpop.f32.mrf.mxu0
        %1485 = vdwg.mxu0
        %1486 = vst [vmem:[%s956] sm:$0xff] %v1483
        %s1487 = sand.u32 %s492, 1
        %s1488 = scalar_lea.sflag [#allocation4], %s1487
        %s1489 = sand.u32 %s492, 1
        %s1490 = smul.addr %s1489, 8
        %s1491 = scalar_lea.vmem [#allocation25], %s1490
        %s1492 = sand.u32 %s54, 1
        %s1493 = scalar_lea.sflag [#allocation27], %s1492
        %s1494 = sand.u32 %s518, 1
        %s1495 = scalar_lea.vmem [#allocation26], %s1494
        %s1496 = sand.u32 %s54, 1
        %s1497 = scalar_lea.sflag [#allocation27], %s1496
        %s1498 = sand.u32 %s544, 1
        %s1499 = smul.addr %s1498, 16
        %s1500 = scalar_lea.vmem [#allocation28], %s1499
        %s1501 = sand.u32 %s570, 1
        %s1502 = scalar_lea.sflag [#allocation30], %s1501
        %s1503 = sand.u32 %s570, 1
        %s1504 = smul.addr %s1503, 8
        %s1505 = scalar_lea.vmem [#allocation29], %s1504
        // Predicated region
        $region157: #{tpu_custom_call.1} parent=99 // pred_check
          %p1506 = pneg %p502
        $region158: #{tpu_custom_call.1} parent=99 // pred_check_branch
          %1508 = sbr.rel (%p1506) target = $region160
        $region159: #{tpu_custom_call.1} parent=99 // pred_region
          %1510 = vsyncadd %s1488, 0
          %s1511 = smul.addr %s54, 8
          %s1512 = scalar_lea.hbm %s20, %s1511
          %s1514 = sshll.u32 %s1491, 4
          %s1515 = int_to_ptr.vmem [resolvable:$true] %s1514
          %s1516 = sshll.u32 %s1512, 4
          %s1517 = int_to_ptr.hbm [resolvable:$true] %s1516
          %1519 = dma.vmem_to_hbm [thread:$0]  %s1515, 128, %s1517, %s1488
        $region160: #{tpu_custom_call.1} parent=99 // pred_fallthru
          _
        // Predicated region
        $region161: #{tpu_custom_call.1} parent=99 // pred_check
          %p1520 = pneg %p528
        $region162: #{tpu_custom_call.1} parent=99 // pred_check_branch
          %1522 = sbr.rel (%p1520) target = $region164
        $region163: #{tpu_custom_call.1} parent=99 // pred_region
          %1524 = vsyncadd %s1493, 0
          %s1525 = scalar_lea.hbm %s21, %s54
          %s1527 = sshll.u32 %s1495, 4
          %s1528 = int_to_ptr.vmem [resolvable:$true] %s1527
          %s1529 = sshll.u32 %s1525, 4
          %s1530 = int_to_ptr.hbm [resolvable:$true] %s1529
          %1532 = dma.vmem_to_hbm [thread:$0]  %s1528, 16, %s1530, %s1493
        $region164: #{tpu_custom_call.1} parent=99 // pred_fallthru
          _
        // Predicated region
        $region165: #{tpu_custom_call.1} parent=99 // pred_check
          %p1533 = pneg %p554
        $region166: #{tpu_custom_call.1} parent=99 // pred_check_branch
          %1535 = sbr.rel (%p1533) target = $region168
        $region167: #{tpu_custom_call.1} parent=99 // pred_region
          %1537 = vsyncadd %s1497, 0
          %s1538 = smul.addr %s54, 2
          %s1539 = smul.addr %s1538, 8
          %s1540 = scalar_lea.hbm %s22, %s1539
          %s1541 = sshll.u32 %s1500, 4
          %s1542 = int_to_ptr.vmem [resolvable:$true] %s1541
          %s1543 = sshll.u32 %s1540, 4
          %s1544 = int_to_ptr.hbm [resolvable:$true] %s1543
          %1549 = dma.vmem_to_hbm [thread:$0]  %s1542, 256, %s1544, %s1497, 128, 128, 8
        $region168: #{tpu_custom_call.1} parent=99 // pred_fallthru
          _
        // Predicated region
        $region169: #{tpu_custom_call.1} parent=99 // pred_check
          %p1550 = pneg %p580
        $region170: #{tpu_custom_call.1} parent=99 // pred_check_branch
          %1552 = sbr.rel (%p1550) target = $region172
        $region171: #{tpu_custom_call.1} parent=99 // pred_region
          %1554 = vsyncadd %s1502, 0
          %s1555 = smul.addr %s54, 8
          %s1556 = scalar_lea.hbm %s23, %s1555
          %s1558 = sshll.u32 %s1505, 4
          %s1559 = int_to_ptr.vmem [resolvable:$true] %s1558
          %s1560 = sshll.u32 %s1556, 4
          %s1561 = int_to_ptr.hbm [resolvable:$true] %s1560
          %1563 = dma.vmem_to_hbm [thread:$0]  %s1559, 128, %s1561, %s1502
        $region172: #{tpu_custom_call.1} parent=99 // pred_fallthru
          _
      $region100: #{tpu_custom_call.1} parent=5 // pred_fallthru
        _
      %p1564 = scmp.le.s32.totalorder 2, %s49
      // Predicated region
      $region173: #{tpu_custom_call.1} parent=5 // pred_check
        %p1565 = pneg %p1564
      $region174: #{tpu_custom_call.1} parent=5 // pred_check_branch
        %1567 = sbr.rel (%p1565) target = $region176
      $region175: #{tpu_custom_call.1} parent=5 // pred_region
        %s1568 = ssub.s32 %s49, 2
        // Predicated region
        $region177: #{tpu_custom_call.1} parent=175 // pred_check
          %p1569 = pneg %p508
        $region178: #{tpu_custom_call.1} parent=175 // pred_check_branch
          %1571 = sbr.rel (%p1569) target = $region180
        $region179: #{tpu_custom_call.1} parent=175 // pred_region
          %s1572 = sand.u32 %s493, 1
          %s1573 = scalar_lea.sflag [#allocation4], %s1572
          %s1574 = sand.u32 %s493, 1
          %s1575 = smul.addr %s1574, 8
          %s1576 = scalar_lea.vmem [#allocation25], %s1575
          %1578 = dma.done %s1573, 128
        $region180: #{tpu_custom_call.1} parent=175 // pred_fallthru
          _
        // Predicated region
        $region181: #{tpu_custom_call.1} parent=175 // pred_check
          %p1579 = pneg %p534
        $region182: #{tpu_custom_call.1} parent=175 // pred_check_branch
          %1581 = sbr.rel (%p1579) target = $region184
        $region183: #{tpu_custom_call.1} parent=175 // pred_region
          %s1582 = sand.u32 %s55, 1
          %s1583 = scalar_lea.sflag [#allocation27], %s1582
          %s1584 = sand.u32 %s519, 1
          %s1585 = scalar_lea.vmem [#allocation26], %s1584
          %1587 = dma.done %s1583, 16
        $region184: #{tpu_custom_call.1} parent=175 // pred_fallthru
          _
        // Predicated region
        $region185: #{tpu_custom_call.1} parent=175 // pred_check
          %p1588 = pneg %p560
        $region186: #{tpu_custom_call.1} parent=175 // pred_check_branch
          %1590 = sbr.rel (%p1588) target = $region188
        $region187: #{tpu_custom_call.1} parent=175 // pred_region
          %s1591 = sand.u32 %s55, 1
          %s1592 = scalar_lea.sflag [#allocation27], %s1591
          %s1593 = sand.u32 %s545, 1
          %s1594 = smul.addr %s1593, 16
          %s1595 = scalar_lea.vmem [#allocation28], %s1594
          %1597 = dma.done %s1592, 256
        $region188: #{tpu_custom_call.1} parent=175 // pred_fallthru
          _
        // Predicated region
        $region189: #{tpu_custom_call.1} parent=175 // pred_check
          %p1598 = pneg %p586
        $region190: #{tpu_custom_call.1} parent=175 // pred_check_branch
          %1600 = sbr.rel (%p1598) target = $region192
        $region191: #{tpu_custom_call.1} parent=175 // pred_region
          %s1601 = sand.u32 %s571, 1
          %s1602 = scalar_lea.sflag [#allocation30], %s1601
          %s1603 = sand.u32 %s571, 1
          %s1604 = smul.addr %s1603, 8
          %s1605 = scalar_lea.vmem [#allocation29], %s1604
          %1607 = dma.done %s1602, 128
        $region192: #{tpu_custom_call.1} parent=175 // pred_fallthru
          _
      $region176: #{tpu_custom_call.1} parent=5 // pred_fallthru
        _
    $region6: #{tpu_custom_call.1} parent=1 // loop_footer
      %s53 = sadd.s32 1, %s49
    $region7: #{tpu_custom_call.1} parent=1 // loop_footer_branch
      %48 = sbr.rel target = $region3
    $region8: #{tpu_custom_call.1} parent=1 // loop_exit
      _
    %1608 = vsyncpa [#allocation3], 1
    %s1609 = scalar_lea.sflag [#allocation3], 1
    %1610 = vsyncpa %s1609, 1
    %1611 = vsyncpa [#allocation6], 1
    %1612 = vsyncpa [#allocation9], 1
    %1613 = vsyncpa [#allocation12], 1
    %1614 = vsyncpa [#allocation15], 1
    %1615 = vsyncpa [#allocation18], 1
    %1616 = vsyncpa [#allocation21], 1
    %1617 = vsyncpa [#allocation24], 1
    %1618 = vsyncpa [#allocation4], 1
    %s1619 = scalar_lea.sflag [#allocation4], 1
    %1620 = vsyncpa %s1619, 1
    %1621 = vsyncpa [#allocation27], 1
    %s1622 = scalar_lea.sflag [#allocation27], 1
    %1623 = vsyncpa %s1622, 1
    %1624 = vsyncpa [#allocation30], 1
    %s1625 = scalar_lea.sflag [#allocation30], 1
    %1626 = vsyncpa %s1625, 1

</llo_original>
